<compile_context>
chip_gen: v7x
topology: tpu7x:2x2x1
jax: 0.10.0
libtpu: 0.0.40
codegen_flags: <defaults>
</compile_context>

<pallas_src>
import jax
import jax.numpy as jnp
from jax.experimental import pallas as pl
from jax.experimental.pallas import tpu as pltpu


def _round_up(n: int, m: int) -> int:
    return (n + m - 1) // m * m


def _default_batch_tile(B: int) -> int:
    """Batch tile: big enough to feed the MXU / amortize per-step overhead,
    while guaranteeing >=2 grid steps (both v7x TCs) whenever B permits."""
    Bp8 = _round_up(max(B, 1), 8)
    if Bp8 <= 16:
        return Bp8                                  # tiny batch: single tile
    if Bp8 <= 1024:
        return _round_up((Bp8 + 1) // 2, 8)         # two tiles -> 2-step parallel grid
    return 512                                      # large batch: 512-row tiles


def _decoder_kernel(x_ref,
                    w1_ref, b1_ref,
                    w2_ref, b2_ref,
                    w3_ref, b3_ref,
                    w4_ref, b4_ref,
                    w5_ref, b5_ref,
                    o_ref):
    """Whole 5-layer MLP decoder for one batch tile, fully resident in VMEM."""

    def layer(a, w_ref, b_ref):
        w = w_ref[...]
        # Activation cast to the weight dtype (f32 or bf16 MXU inputs),
        # f32 accumulation, f32 (1, out) bias broadcast-add.
        return jnp.dot(a.astype(w.dtype), w,
                       preferred_element_type=jnp.float32) + b_ref[...]

    a = jnp.maximum(x_ref[...].astype(jnp.float32), 0.0)    # relu(features)
    a = jnp.maximum(layer(a, w1_ref, b1_ref), 0.0)           # 16  -> 32
    a = jnp.maximum(layer(a, w2_ref, b2_ref), 0.0)           # 32  -> 128
    a = jnp.maximum(layer(a, w3_ref, b3_ref), 0.0)           # 128 -> 256
    a = jnp.maximum(layer(a, w4_ref, b4_ref), 0.0)           # 256 -> 512
    a = jnp.maximum(layer(a, w5_ref, b5_ref), 0.0)           # 512 -> input_shape
    o_ref[...] = a.astype(o_ref.dtype)


def prepare_decoder_params(params, weights_dtype=jnp.bfloat16):
    """One-time parameter prep (hoisted out of the per-call path).

    params: list of (W, b) with W shaped (in, out) — i.e. PyTorch weight
    transposed.  Returns a flat tuple (w1, b1, ..., w5, b5) with weights cast
    to `weights_dtype` and biases as f32 row vectors.
    """
    flat = []
    for (w, b) in params:
        flat.append(jnp.asarray(w, weights_dtype))
        flat.append(jnp.asarray(b, jnp.float32).reshape(1, -1))
    return tuple(flat)


def linear_decoder_pallas(x, flat_params, *, batch_tile=None,
                          out_dtype=jnp.float32):
    """x: (B, 16).  flat_params: output of prepare_decoder_params.

    batch_tile: rows per grid step (auto-chosen if None; tuning knob).
    out_dtype:  f32 (default, exact module semantics) or bf16 (halves the
                output HBM write if the consumer tolerates it).
    """
    B, d_in = x.shape
    wb_shapes = [flat_params[2 * i].shape for i in range(5)]   # [(16,32),...]
    d_out = wb_shapes[-1][1]

    if batch_tile is None:
        batch_tile = _default_batch_tile(B)
    batch_tile = max(8, _round_up(int(batch_tile), 8))
    batch_tile = min(batch_tile, _round_up(B, 8))   # never larger than needed

    grid = (pl.cdiv(B, batch_tile),)                # ragged last block clipped by Pallas

    def x_map(i):
        return (i, 0)

    def const_map(i):
        return (0, 0)

    in_specs = [pl.BlockSpec((batch_tile, d_in), x_map)]
    for idx, (wi, wo) in enumerate(wb_shapes):
        in_specs.append(pl.BlockSpec((wi, wo), const_map))     # full-extent weight
        in_specs.append(pl.BlockSpec((1, wo), const_map))      # full-extent bias
    out_spec = pl.BlockSpec((batch_tile, d_out), x_map)

    cost = pl.CostEstimate(
        flops=int(2 * B * sum(wi * wo for (wi, wo) in wb_shapes)),
        transcendentals=0,
        bytes_accessed=int(x.size * x.dtype.itemsize
                           + sum(a.size * a.dtype.itemsize for a in flat_params)
                           + B * d_out * jnp.dtype(out_dtype).itemsize),
    )

    return pl.pallas_call(
        _decoder_kernel,
        out_shape=jax.ShapeDtypeStruct((B, d_out), out_dtype),
        grid_spec=pltpu.PrefetchScalarGridSpec(
            num_scalar_prefetch=0,
            grid=grid,
            in_specs=in_specs,
            out_specs=out_spec,
        ),
        compiler_params=pltpu.CompilerParams(
            dimension_semantics=("parallel",),
            vmem_limit_bytes=48 * 1024 * 1024,      # fits v7x 64 MiB per-TC VMEM
        ),
        cost_estimate=cost,
    )(x, *flat_params)


def _init_params(key, input_shape):
    """Deterministic init matching the PyTorch layer shapes (W stored as (in,out))."""
    sizes = [(16, 32), (32, 128), (128, 256), (256, 512), (512, input_shape)]
    params = []
    for (fan_in, fan_out) in sizes:
        key, kw, kb = jax.random.split(key, 3)
        bound = 1.0 / (fan_in ** 0.5)
        w = jax.random.uniform(kw, (fan_in, fan_out), jnp.float32, -bound, bound)
        b = jax.random.uniform(kb, (fan_out,), jnp.float32, -bound, bound)
        params.append((w, b))
    return params


def _reference(x, params):
    a = jnp.maximum(x, 0.0)
    for (w, b) in params:
        a = jnp.maximum(a @ w + b, 0.0)
    return a


if __name__ == "__main__":
    INPUT_SHAPE = 784          # kwargs['input_shape']
    B = 20                     # not a tile multiple: exercises ragged last block + 2-step grid

    key = jax.random.PRNGKey(0)
    key, kx = jax.random.split(key)
    x = jax.random.normal(kx, (B, 16), jnp.float32)
    params = _init_params(key, INPUT_SHAPE)

    ref = _reference(x, params)

    run = jax.jit(lambda xin, *p: linear_decoder_pallas(xin, p))

    # Exact f32 path (weights prepared once, outside the call).
    flat_f32 = prepare_decoder_params(params, weights_dtype=jnp.float32)
    out = jax.block_until_ready(run(x, *flat_f32))
    assert out.shape == (B, INPUT_SHAPE), out.shape
    assert jnp.allclose(out, ref, atol=1e-4, rtol=1e-4), "f32 mismatch vs reference"

    # Default bf16-weight path (f32 accumulation): faster, loose tolerance.
    flat_bf16 = prepare_decoder_params(params)          # bf16 weights (default)
    out_bf16 = jax.block_until_ready(run(x, *flat_bf16))
    assert out_bf16.shape == (B, INPUT_SHAPE), out_bf16.shape
    rel = jnp.linalg.norm(out_bf16 - ref) / (jnp.linalg.norm(ref) + 1e-6)
    assert float(rel) < 5e-2, float(rel)

    print("KERNEL_OK")
</pallas_src>

<mosaic_0001>
module attributes {stable_mosaic.version = 11 : i64} {
  func.func @_decoder_kernel(%arg0: i32, %arg1: memref<16x16xf32, #tpu.memory_space<vmem>>, %arg2: memref<16x32xf32, #tpu.memory_space<vmem>>, %arg3: memref<1x32xf32, #tpu.memory_space<vmem>>, %arg4: memref<32x128xf32, #tpu.memory_space<vmem>>, %arg5: memref<1x128xf32, #tpu.memory_space<vmem>>, %arg6: memref<128x256xf32, #tpu.memory_space<vmem>>, %arg7: memref<1x256xf32, #tpu.memory_space<vmem>>, %arg8: memref<256x512xf32, #tpu.memory_space<vmem>>, %arg9: memref<1x512xf32, #tpu.memory_space<vmem>>, %arg10: memref<512x784xf32, #tpu.memory_space<vmem>>, %arg11: memref<1x784xf32, #tpu.memory_space<vmem>>, %arg12: memref<16x784xf32, #tpu.memory_space<vmem>>) attributes {dimension_semantics = [#tpu.dimension_semantics<parallel>], iteration_bounds = array<i64: 2>, scalar_prefetch = 0 : i64, scratch_operands = 0 : i64, tpu.core_type = #tpu.core_type<tc>, window_params = [{transform_indices = @transform_0, window_bounds = array<i64: 16, 16>}, {pipeline_mode = #tpu.pipeline_mode<synchronous>, transform_indices = @transform_1, window_bounds = array<i64: 16, 32>}, {pipeline_mode = #tpu.pipeline_mode<synchronous>, transform_indices = @transform_2, window_bounds = array<i64: 1, 32>}, {pipeline_mode = #tpu.pipeline_mode<synchronous>, transform_indices = @transform_3, window_bounds = array<i64: 32, 128>}, {pipeline_mode = #tpu.pipeline_mode<synchronous>, transform_indices = @transform_4, window_bounds = array<i64: 1, 128>}, {pipeline_mode = #tpu.pipeline_mode<synchronous>, transform_indices = @transform_5, window_bounds = array<i64: 128, 256>}, {pipeline_mode = #tpu.pipeline_mode<synchronous>, transform_indices = @transform_6, window_bounds = array<i64: 1, 256>}, {pipeline_mode = #tpu.pipeline_mode<synchronous>, transform_indices = @transform_7, window_bounds = array<i64: 256, 512>}, {pipeline_mode = #tpu.pipeline_mode<synchronous>, transform_indices = @transform_8, window_bounds = array<i64: 1, 512>}, {pipeline_mode = #tpu.pipeline_mode<synchronous>, transform_indices = @transform_9, window_bounds = array<i64: 512, 784>}, {pipeline_mode = #tpu.pipeline_mode<synchronous>, transform_indices = @transform_10, window_bounds = array<i64: 1, 784>}, {transform_indices = @transform_11, window_bounds = array<i64: 16, 784>}]} {
    %c0 = arith.constant 0 : index
    %c0_0 = arith.constant 0 : index
    %0 = vector.load %arg1[%c0, %c0_0] : memref<16x16xf32, #tpu.memory_space<vmem>>, vector<16x16xf32>
    %cst = arith.constant 0.000000e+00 : f32
    %1 = vector.broadcast %cst : f32 to vector<16x16xf32>
    %2 = arith.maximumf %0, %1 : vector<16x16xf32>
    %c0_1 = arith.constant 0 : index
    %c0_2 = arith.constant 0 : index
    %3 = vector.load %arg2[%c0_1, %c0_2] : memref<16x32xf32, #tpu.memory_space<vmem>>, vector<16x32xf32>
    %cst_3 = arith.constant dense<0.000000e+00> : vector<16x32xf32>
    %4 = tpu.matmul %2, %3, %cst_3 {dimension_numbers = #tpu.dot_dimension_numbers<[1], [0], [0], [1], [0, 0, 1, 1], [], []>} : vector<16x16xf32>, vector<16x32xf32>, vector<16x32xf32> -> vector<16x32xf32>
    %c0_4 = arith.constant 0 : index
    %c0_5 = arith.constant 0 : index
    %5 = vector.load %arg3[%c0_4, %c0_5] : memref<1x32xf32, #tpu.memory_space<vmem>>, vector<1x32xf32>
    %6 = vector.broadcast %5 : vector<1x32xf32> to vector<16x32xf32>
    %7 = arith.addf %4, %6 : vector<16x32xf32>
    %cst_6 = arith.constant 0.000000e+00 : f32
    %8 = vector.broadcast %cst_6 : f32 to vector<16x32xf32>
    %9 = arith.maximumf %7, %8 : vector<16x32xf32>
    %c0_7 = arith.constant 0 : index
    %c0_8 = arith.constant 0 : index
    %10 = vector.load %arg4[%c0_7, %c0_8] : memref<32x128xf32, #tpu.memory_space<vmem>>, vector<32x128xf32>
    %cst_9 = arith.constant dense<0.000000e+00> : vector<16x128xf32>
    %11 = tpu.matmul %9, %10, %cst_9 {dimension_numbers = #tpu.dot_dimension_numbers<[1], [0], [0], [1], [0, 0, 1, 1], [], []>} : vector<16x32xf32>, vector<32x128xf32>, vector<16x128xf32> -> vector<16x128xf32>
    %c0_10 = arith.constant 0 : index
    %c0_11 = arith.constant 0 : index
    %12 = vector.load %arg5[%c0_10, %c0_11] : memref<1x128xf32, #tpu.memory_space<vmem>>, vector<1x128xf32>
    %13 = vector.broadcast %12 : vector<1x128xf32> to vector<16x128xf32>
    %14 = arith.addf %11, %13 : vector<16x128xf32>
    %cst_12 = arith.constant 0.000000e+00 : f32
    %15 = vector.broadcast %cst_12 : f32 to vector<16x128xf32>
    %16 = arith.maximumf %14, %15 : vector<16x128xf32>
    %c0_13 = arith.constant 0 : index
    %c0_14 = arith.constant 0 : index
    %17 = vector.load %arg6[%c0_13, %c0_14] : memref<128x256xf32, #tpu.memory_space<vmem>>, vector<128x256xf32>
    %cst_15 = arith.constant dense<0.000000e+00> : vector<16x256xf32>
    %18 = tpu.matmul %16, %17, %cst_15 {dimension_numbers = #tpu.dot_dimension_numbers<[1], [0], [0], [1], [0, 0, 1, 1], [], []>} : vector<16x128xf32>, vector<128x256xf32>, vector<16x256xf32> -> vector<16x256xf32>
    %c0_16 = arith.constant 0 : index
    %c0_17 = arith.constant 0 : index
    %19 = vector.load %arg7[%c0_16, %c0_17] : memref<1x256xf32, #tpu.memory_space<vmem>>, vector<1x256xf32>
    %20 = vector.broadcast %19 : vector<1x256xf32> to vector<16x256xf32>
    %21 = arith.addf %18, %20 : vector<16x256xf32>
    %cst_18 = arith.constant 0.000000e+00 : f32
    %22 = vector.broadcast %cst_18 : f32 to vector<16x256xf32>
    %23 = arith.maximumf %21, %22 : vector<16x256xf32>
    %c0_19 = arith.constant 0 : index
    %c0_20 = arith.constant 0 : index
    %24 = vector.load %arg8[%c0_19, %c0_20] : memref<256x512xf32, #tpu.memory_space<vmem>>, vector<256x512xf32>
    %cst_21 = arith.constant dense<0.000000e+00> : vector<16x512xf32>
    %25 = tpu.matmul %23, %24, %cst_21 {dimension_numbers = #tpu.dot_dimension_numbers<[1], [0], [0], [1], [0, 0, 1, 1], [], []>} : vector<16x256xf32>, vector<256x512xf32>, vector<16x512xf32> -> vector<16x512xf32>
    %c0_22 = arith.constant 0 : index
    %c0_23 = arith.constant 0 : index
    %26 = vector.load %arg9[%c0_22, %c0_23] : memref<1x512xf32, #tpu.memory_space<vmem>>, vector<1x512xf32>
    %27 = vector.broadcast %26 : vector<1x512xf32> to vector<16x512xf32>
    %28 = arith.addf %25, %27 : vector<16x512xf32>
    %cst_24 = arith.constant 0.000000e+00 : f32
    %29 = vector.broadcast %cst_24 : f32 to vector<16x512xf32>
    %30 = arith.maximumf %28, %29 : vector<16x512xf32>
    %c0_25 = arith.constant 0 : index
    %c0_26 = arith.constant 0 : index
    %31 = vector.load %arg10[%c0_25, %c0_26] : memref<512x784xf32, #tpu.memory_space<vmem>>, vector<512x784xf32>
    %cst_27 = arith.constant dense<0.000000e+00> : vector<16x784xf32>
    %32 = tpu.matmul %30, %31, %cst_27 {dimension_numbers = #tpu.dot_dimension_numbers<[1], [0], [0], [1], [0, 0, 1, 1], [], []>} : vector<16x512xf32>, vector<512x784xf32>, vector<16x784xf32> -> vector<16x784xf32>
    %c0_28 = arith.constant 0 : index
    %c0_29 = arith.constant 0 : index
    %33 = vector.load %arg11[%c0_28, %c0_29] : memref<1x784xf32, #tpu.memory_space<vmem>>, vector<1x784xf32>
    %34 = vector.broadcast %33 : vector<1x784xf32> to vector<16x784xf32>
    %35 = arith.addf %32, %34 : vector<16x784xf32>
    %cst_30 = arith.constant 0.000000e+00 : f32
    %36 = vector.broadcast %cst_30 : f32 to vector<16x784xf32>
    %37 = arith.maximumf %35, %36 : vector<16x784xf32>
    %c0_31 = arith.constant 0 : index
    %c0_32 = arith.constant 0 : index
    %38 = vector.load %arg12[%c0_31, %c0_32] : memref<16x784xf32, #tpu.memory_space<vmem>>, vector<16x784xf32>
    tpu.vector_store %arg12[%c0_31, %c0_32], %37 {strides = array<i32>} : memref<16x784xf32, #tpu.memory_space<vmem>>, vector<16x784xf32>,
    return
  }
  func.func @transform_0(%arg0: i32) -> (i32, i32) {
    %c0_i32 = arith.constant 0 : i32
    %c0_i32_0 = arith.constant 0 : i32
    return %arg0, %c0_i32 : i32, i32
  }
  func.func @transform_1(%arg0: i32) -> (i32, i32) {
    %c0_i32 = arith.constant 0 : i32
    %c0_i32_0 = arith.constant 0 : i32
    %c0_i32_1 = arith.constant 0 : i32
    return %c0_i32, %c0_i32_0 : i32, i32
  }
  func.func @transform_2(%arg0: i32) -> (i32, i32) {
    %c0_i32 = arith.constant 0 : i32
    %c0_i32_0 = arith.constant 0 : i32
    %c0_i32_1 = arith.constant 0 : i32
    return %c0_i32, %c0_i32_0 : i32, i32
  }
  func.func @transform_3(%arg0: i32) -> (i32, i32) {
    %c0_i32 = arith.constant 0 : i32
    %c0_i32_0 = arith.constant 0 : i32
    %c0_i32_1 = arith.constant 0 : i32
    return %c0_i32, %c0_i32_0 : i32, i32
  }
  func.func @transform_4(%arg0: i32) -> (i32, i32) {
    %c0_i32 = arith.constant 0 : i32
    %c0_i32_0 = arith.constant 0 : i32
    %c0_i32_1 = arith.constant 0 : i32
    return %c0_i32, %c0_i32_0 : i32, i32
  }
  func.func @transform_5(%arg0: i32) -> (i32, i32) {
    %c0_i32 = arith.constant 0 : i32
    %c0_i32_0 = arith.constant 0 : i32
    %c0_i32_1 = arith.constant 0 : i32
    return %c0_i32, %c0_i32_0 : i32, i32
  }
  func.func @transform_6(%arg0: i32) -> (i32, i32) {
    %c0_i32 = arith.constant 0 : i32
    %c0_i32_0 = arith.constant 0 : i32
    %c0_i32_1 = arith.constant 0 : i32
    return %c0_i32, %c0_i32_0 : i32, i32
  }
  func.func @transform_7(%arg0: i32) -> (i32, i32) {
    %c0_i32 = arith.constant 0 : i32
    %c0_i32_0 = arith.constant 0 : i32
    %c0_i32_1 = arith.constant 0 : i32
    return %c0_i32, %c0_i32_0 : i32, i32
  }
  func.func @transform_8(%arg0: i32) -> (i32, i32) {
    %c0_i32 = arith.constant 0 : i32
    %c0_i32_0 = arith.constant 0 : i32
    %c0_i32_1 = arith.constant 0 : i32
    return %c0_i32, %c0_i32_0 : i32, i32
  }
  func.func @transform_9(%arg0: i32) -> (i32, i32) {
    %c0_i32 = arith.constant 0 : i32
    %c0_i32_0 = arith.constant 0 : i32
    %c0_i32_1 = arith.constant 0 : i32
    return %c0_i32, %c0_i32_0 : i32, i32
  }
  func.func @transform_10(%arg0: i32) -> (i32, i32) {
    %c0_i32 = arith.constant 0 : i32
    %c0_i32_0 = arith.constant 0 : i32
    %c0_i32_1 = arith.constant 0 : i32
    return %c0_i32, %c0_i32_0 : i32, i32
  }
  func.func @transform_11(%arg0: i32) -> (i32, i32) {
    %c0_i32 = arith.constant 0 : i32
    %c0_i32_0 = arith.constant 0 : i32
    return %arg0, %c0_i32 : i32, i32
  }
}

</mosaic_0001>

<llo_original>
// kernel: _lambda_.1
$region0: #{_lambda_.1}
  #allocation0 [shape = 'u32[]', space=smem, size = 0x4, offset = 0x4, fixed_abs, tag = 'smem constant byte address 0x4 - core index']
  #allocation1 [shape = 'u32[144,128]{1,0:T(1,128)}', space=vmem, size = 0x12000, scoped, tag = 'internal scratch']
  %s0 = inlined_call_operand.vmem [shape: f32[20,16], index: 0, kind: input, shape index: {}]
  %s1 = inlined_call_operand.vmem [shape: f32[16,32], index: 1, kind: input, shape index: {}]
  %s2 = inlined_call_operand.vmem [shape: f32[1,32], index: 2, kind: input, shape index: {}]
  %s3 = inlined_call_operand.vmem [shape: f32[32,128], index: 3, kind: input, shape index: {}]
  %s4 = inlined_call_operand.vmem [shape: f32[1,128], index: 4, kind: input, shape index: {}]
  %s5 = inlined_call_operand.vmem [shape: f32[128,256], index: 5, kind: input, shape index: {}]
  %s6 = inlined_call_operand.vmem [shape: f32[1,256], index: 6, kind: input, shape index: {}]
  %s7 = inlined_call_operand.vmem [shape: f32[256,512], index: 7, kind: input, shape index: {}]
  %s8 = inlined_call_operand.vmem [shape: f32[1,512], index: 8, kind: input, shape index: {}]
  %s9 = inlined_call_operand.vmem [shape: f32[512,784], index: 9, kind: input, shape index: {}]
  %s10 = inlined_call_operand.vmem [shape: f32[1,784], index: 10, kind: input, shape index: {}]
  %s11 = inlined_call_operand.hbm [shape: f32[20,784], index: 11, kind: output, shape index: {}]
  %s12 = sld [smem:[#allocation0]]
  $region77: #{_lambda_.1} parent=0
    _
  %s14 = ssub.s32 1, %s12
  %s15 = scalar_select 0, %s14, %s12
  $region1: #{_lambda_.1} parent=0
    #allocation2 [shape = 'u8[114688]{0}', space=vmem, size = 0x1c000, scoped, tag = 'output window, operand 0']
    #allocation3 [shape = 's32[2]{0}', space=sflag, size = 0x8, scoped, tag = 'scoped memory for _lambda_.1']
    %16 = vsyncpa [#allocation3], 0
    %s17 = scalar_lea.sflag [#allocation3], 1
    %18 = vsyncpa %s17, 0
    loop: start=0, step=1, limit=4
    $region2: #{_lambda_.1} parent=1 // loop_pre_header
      _
    $region3: #{_lambda_.1} parent=1 // loop_header
      %s20 = sphi 0, %s24
      %p21 = scmp.ge.s32.totalorder %s20, 4
      %s30 = sphi 0, %s32
      %s33 = sphi 0, %s30
      %s34 = sphi 0, %s33
      %s50 = sphi 0, %s34
      %s54 = sphi 0, %s54
      %s56 = sphi 0, %s54
      %s57 = sphi 0, %s56
      %s71 = sphi 0, %s57
      %s75 = sphi 0, %s75
      %s77 = sphi 0, %s75
      %s78 = sphi 0, %s77
      %s92 = sphi 0, %s78
      %s96 = sphi 0, %s96
      %s98 = sphi 0, %s96
      %s99 = sphi 0, %s98
      %s113 = sphi 0, %s99
      %s117 = sphi 0, %s117
      %s119 = sphi 0, %s117
      %s120 = sphi 0, %s119
      %s134 = sphi 0, %s120
      %s138 = sphi 0, %s138
      %s140 = sphi 0, %s138
      %s141 = sphi 0, %s140
      %s155 = sphi 0, %s141
      %s159 = sphi 0, %s159
      %s161 = sphi 0, %s159
      %s162 = sphi 0, %s161
      %s176 = sphi 0, %s162
      %s180 = sphi 0, %s180
      %s182 = sphi 0, %s180
      %s183 = sphi 0, %s182
      %s197 = sphi 0, %s183
      %s201 = sphi 0, %s201
      %s203 = sphi 0, %s201
      %s204 = sphi 0, %s203
      %s218 = sphi 0, %s204
      %s222 = sphi 0, %s222
      %s224 = sphi 0, %s222
      %s225 = sphi 0, %s224
      %s239 = sphi 0, %s225
      %s243 = sphi 0, %s243
      %s245 = sphi 0, %s243
      %s246 = sphi 0, %s245
      %s260 = sphi 0, %s246
      %s266 = sphi 0, %s268
      %s269 = sphi 0, %s266
      %s270 = sphi 0, %s269
      %s286 = sphi 0, %s270
    $region4: #{_lambda_.1} parent=1 // loop_header_branch
      %23 = sbr.rel (%p21) target = $region8
    $region5: #{_lambda_.1} parent=1 // loop_body
      %s25 = ssub.s32 %s20, 1
      %s26 = ssub.s32 %s20, 2
      %s27 = sadd.s32 %s20, 1
      %s28 = ssub.s32 %s20, %s27
      %p29 = scmp.eq.s32.totalorder %s28, 0
      %s31 = sadd.s32 %s30, 1
      %s32 = scalar_select %p29, %s30, %s31
      %p35 = pneg %p29
      %p36 = scmp.eq.s32.totalorder %s20, 1
      %p37 = por %p35, %p36
      %p38 = scmp.ne.s32.totalorder %s30, %s33
      %p39 = scmp.eq.s32.totalorder %s20, 0
      %p40 = por %p38, %p39
      %p41 = scmp.ne.s32.totalorder %s30, %s33
      %p42 = scmp.eq.s32.totalorder %s25, 1
      %p43 = por %p41, %p42
      %p44 = scmp.ne.s32.totalorder %s33, %s34
      %p45 = scmp.eq.s32.totalorder %s25, 0
      %p46 = por %p44, %p45
      %p47 = scmp.ne.s32.totalorder %s33, %s34
      %p48 = scmp.eq.s32.totalorder %s26, 1
      %p49 = por %p47, %p48
      %p51 = scmp.ne.s32.totalorder %s34, %s50
      %p52 = scmp.eq.s32.totalorder %s26, 0
      %p53 = por %p51, %p52
      %s55 = sadd.s32 %s54, 1
      %p58 = scmp.eq.s32.totalorder %s20, 1
      %p59 = scmp.ne.s32.totalorder %s54, %s56
      %p60 = scmp.eq.s32.totalorder %s20, 0
      %p61 = por %p59, %p60
      %p62 = scmp.ne.s32.totalorder %s54, %s56
      %p63 = scmp.eq.s32.totalorder %s25, 1
      %p64 = por %p62, %p63
      %p65 = scmp.ne.s32.totalorder %s56, %s57
      %p66 = scmp.eq.s32.totalorder %s25, 0
      %p67 = por %p65, %p66
      %p68 = scmp.ne.s32.totalorder %s56, %s57
      %p69 = scmp.eq.s32.totalorder %s26, 1
      %p70 = por %p68, %p69
      %p72 = scmp.ne.s32.totalorder %s57, %s71
      %p73 = scmp.eq.s32.totalorder %s26, 0
      %p74 = por %p72, %p73
      %s76 = sadd.s32 %s75, 1
      %p79 = scmp.eq.s32.totalorder %s20, 1
      %p80 = scmp.ne.s32.totalorder %s75, %s77
      %p81 = scmp.eq.s32.totalorder %s20, 0
      %p82 = por %p80, %p81
      %p83 = scmp.ne.s32.totalorder %s75, %s77
      %p84 = scmp.eq.s32.totalorder %s25, 1
      %p85 = por %p83, %p84
      %p86 = scmp.ne.s32.totalorder %s77, %s78
      %p87 = scmp.eq.s32.totalorder %s25, 0
      %p88 = por %p86, %p87
      %p89 = scmp.ne.s32.totalorder %s77, %s78
      %p90 = scmp.eq.s32.totalorder %s26, 1
      %p91 = por %p89, %p90
      %p93 = scmp.ne.s32.totalorder %s78, %s92
      %p94 = scmp.eq.s32.totalorder %s26, 0
      %p95 = por %p93, %p94
      %s97 = sadd.s32 %s96, 1
      %p100 = scmp.eq.s32.totalorder %s20, 1
      %p101 = scmp.ne.s32.totalorder %s96, %s98
      %p102 = scmp.eq.s32.totalorder %s20, 0
      %p103 = por %p101, %p102
      %p104 = scmp.ne.s32.totalorder %s96, %s98
      %p105 = scmp.eq.s32.totalorder %s25, 1
      %p106 = por %p104, %p105
      %p107 = scmp.ne.s32.totalorder %s98, %s99
      %p108 = scmp.eq.s32.totalorder %s25, 0
      %p109 = por %p107, %p108
      %p110 = scmp.ne.s32.totalorder %s98, %s99
      %p111 = scmp.eq.s32.totalorder %s26, 1
      %p112 = por %p110, %p111
      %p114 = scmp.ne.s32.totalorder %s99, %s113
      %p115 = scmp.eq.s32.totalorder %s26, 0
      %p116 = por %p114, %p115
      %s118 = sadd.s32 %s117, 1
      %p121 = scmp.eq.s32.totalorder %s20, 1
      %p122 = scmp.ne.s32.totalorder %s117, %s119
      %p123 = scmp.eq.s32.totalorder %s20, 0
      %p124 = por %p122, %p123
      %p125 = scmp.ne.s32.totalorder %s117, %s119
      %p126 = scmp.eq.s32.totalorder %s25, 1
      %p127 = por %p125, %p126
      %p128 = scmp.ne.s32.totalorder %s119, %s120
      %p129 = scmp.eq.s32.totalorder %s25, 0
      %p130 = por %p128, %p129
      %p131 = scmp.ne.s32.totalorder %s119, %s120
      %p132 = scmp.eq.s32.totalorder %s26, 1
      %p133 = por %p131, %p132
      %p135 = scmp.ne.s32.totalorder %s120, %s134
      %p136 = scmp.eq.s32.totalorder %s26, 0
      %p137 = por %p135, %p136
      %s139 = sadd.s32 %s138, 1
      %p142 = scmp.eq.s32.totalorder %s20, 1
      %p143 = scmp.ne.s32.totalorder %s138, %s140
      %p144 = scmp.eq.s32.totalorder %s20, 0
      %p145 = por %p143, %p144
      %p146 = scmp.ne.s32.totalorder %s138, %s140
      %p147 = scmp.eq.s32.totalorder %s25, 1
      %p148 = por %p146, %p147
      %p149 = scmp.ne.s32.totalorder %s140, %s141
      %p150 = scmp.eq.s32.totalorder %s25, 0
      %p151 = por %p149, %p150
      %p152 = scmp.ne.s32.totalorder %s140, %s141
      %p153 = scmp.eq.s32.totalorder %s26, 1
      %p154 = por %p152, %p153
      %p156 = scmp.ne.s32.totalorder %s141, %s155
      %p157 = scmp.eq.s32.totalorder %s26, 0
      %p158 = por %p156, %p157
      %s160 = sadd.s32 %s159, 1
      %p163 = scmp.eq.s32.totalorder %s20, 1
      %p164 = scmp.ne.s32.totalorder %s159, %s161
      %p165 = scmp.eq.s32.totalorder %s20, 0
      %p166 = por %p164, %p165
      %p167 = scmp.ne.s32.totalorder %s159, %s161
      %p168 = scmp.eq.s32.totalorder %s25, 1
      %p169 = por %p167, %p168
      %p170 = scmp.ne.s32.totalorder %s161, %s162
      %p171 = scmp.eq.s32.totalorder %s25, 0
      %p172 = por %p170, %p171
      %p173 = scmp.ne.s32.totalorder %s161, %s162
      %p174 = scmp.eq.s32.totalorder %s26, 1
      %p175 = por %p173, %p174
      %p177 = scmp.ne.s32.totalorder %s162, %s176
      %p178 = scmp.eq.s32.totalorder %s26, 0
      %p179 = por %p177, %p178
      %s181 = sadd.s32 %s180, 1
      %p184 = scmp.eq.s32.totalorder %s20, 1
      %p185 = scmp.ne.s32.totalorder %s180, %s182
      %p186 = scmp.eq.s32.totalorder %s20, 0
      %p187 = por %p185, %p186
      %p188 = scmp.ne.s32.totalorder %s180, %s182
      %p189 = scmp.eq.s32.totalorder %s25, 1
      %p190 = por %p188, %p189
      %p191 = scmp.ne.s32.totalorder %s182, %s183
      %p192 = scmp.eq.s32.totalorder %s25, 0
      %p193 = por %p191, %p192
      %p194 = scmp.ne.s32.totalorder %s182, %s183
      %p195 = scmp.eq.s32.totalorder %s26, 1
      %p196 = por %p194, %p195
      %p198 = scmp.ne.s32.totalorder %s183, %s197
      %p199 = scmp.eq.s32.totalorder %s26, 0
      %p200 = por %p198, %p199
      %s202 = sadd.s32 %s201, 1
      %p205 = scmp.eq.s32.totalorder %s20, 1
      %p206 = scmp.ne.s32.totalorder %s201, %s203
      %p207 = scmp.eq.s32.totalorder %s20, 0
      %p208 = por %p206, %p207
      %p209 = scmp.ne.s32.totalorder %s201, %s203
      %p210 = scmp.eq.s32.totalorder %s25, 1
      %p211 = por %p209, %p210
      %p212 = scmp.ne.s32.totalorder %s203, %s204
      %p213 = scmp.eq.s32.totalorder %s25, 0
      %p214 = por %p212, %p213
      %p215 = scmp.ne.s32.totalorder %s203, %s204
      %p216 = scmp.eq.s32.totalorder %s26, 1
      %p217 = por %p215, %p216
      %p219 = scmp.ne.s32.totalorder %s204, %s218
      %p220 = scmp.eq.s32.totalorder %s26, 0
      %p221 = por %p219, %p220
      %s223 = sadd.s32 %s222, 1
      %p226 = scmp.eq.s32.totalorder %s20, 1
      %p227 = scmp.ne.s32.totalorder %s222, %s224
      %p228 = scmp.eq.s32.totalorder %s20, 0
      %p229 = por %p227, %p228
      %p230 = scmp.ne.s32.totalorder %s222, %s224
      %p231 = scmp.eq.s32.totalorder %s25, 1
      %p232 = por %p230, %p231
      %p233 = scmp.ne.s32.totalorder %s224, %s225
      %p234 = scmp.eq.s32.totalorder %s25, 0
      %p235 = por %p233, %p234
      %p236 = scmp.ne.s32.totalorder %s224, %s225
      %p237 = scmp.eq.s32.totalorder %s26, 1
      %p238 = por %p236, %p237
      %p240 = scmp.ne.s32.totalorder %s225, %s239
      %p241 = scmp.eq.s32.totalorder %s26, 0
      %p242 = por %p240, %p241
      %s244 = sadd.s32 %s243, 1
      %p247 = scmp.eq.s32.totalorder %s20, 1
      %p248 = scmp.ne.s32.totalorder %s243, %s245
      %p249 = scmp.eq.s32.totalorder %s20, 0
      %p250 = por %p248, %p249
      %p251 = scmp.ne.s32.totalorder %s243, %s245
      %p252 = scmp.eq.s32.totalorder %s25, 1
      %p253 = por %p251, %p252
      %p254 = scmp.ne.s32.totalorder %s245, %s246
      %p255 = scmp.eq.s32.totalorder %s25, 0
      %p256 = por %p254, %p255
      %p257 = scmp.ne.s32.totalorder %s245, %s246
      %p258 = scmp.eq.s32.totalorder %s26, 1
      %p259 = por %p257, %p258
      %p261 = scmp.ne.s32.totalorder %s246, %s260
      %p262 = scmp.eq.s32.totalorder %s26, 0
      %p263 = por %p261, %p262
      %s264 = ssub.s32 %s20, %s27
      %p265 = scmp.eq.s32.totalorder %s264, 0
      %s267 = sadd.s32 %s266, 1
      %s268 = scalar_select %p265, %s266, %s267
      %p271 = pneg %p265
      %p272 = scmp.eq.s32.totalorder %s20, 1
      %p273 = por %p271, %p272
      %p274 = scmp.ne.s32.totalorder %s266, %s269
      %p275 = scmp.eq.s32.totalorder %s20, 0
      %p276 = por %p274, %p275
      %p277 = scmp.ne.s32.totalorder %s266, %s269
      %p278 = scmp.eq.s32.totalorder %s25, 1
      %p279 = por %p277, %p278
      %p280 = scmp.ne.s32.totalorder %s269, %s270
      %p281 = scmp.eq.s32.totalorder %s25, 0
      %p282 = por %p280, %p281
      %p283 = scmp.ne.s32.totalorder %s269, %s270
      %p284 = scmp.eq.s32.totalorder %s26, 1
      %p285 = por %p283, %p284
      %p287 = scmp.ne.s32.totalorder %s270, %s286
      %p288 = scmp.eq.s32.totalorder %s26, 0
      %p289 = por %p287, %p288
      %p290 = scmp.le.s32.totalorder 1, %s20
      %p291 = scmp.lt.s32.totalorder %s20, 3
      %p292 = pnand %p290, %p291
      %p293 = pneg %p292
      // Predicated region
      $region9: #{_lambda_.1} parent=5 // pred_check
        _
      $region10: #{_lambda_.1} parent=5 // pred_check_branch
        %295 = sbr.rel (%p292) target = $region12
      $region11: #{_lambda_.1} parent=5 // pred_region
        %s296 = ssub.s32 %s20, 1
        // Predicated region
        $region13: #{_lambda_.1} parent=11 // pred_check
          %p297 = pneg %p67
        $region14: #{_lambda_.1} parent=11 // pred_check_branch
          %299 = sbr.rel (%p297) target = $region16
        $region15: #{_lambda_.1} parent=11 // pred_region
          _
        $region16: #{_lambda_.1} parent=11 // pred_fallthru
          _
        // Predicated region
        $region17: #{_lambda_.1} parent=11 // pred_check
          %p300 = pneg %p88
        $region18: #{_lambda_.1} parent=11 // pred_check_branch
          %302 = sbr.rel (%p300) target = $region20
        $region19: #{_lambda_.1} parent=11 // pred_region
          _
        $region20: #{_lambda_.1} parent=11 // pred_fallthru
          _
        // Predicated region
        $region21: #{_lambda_.1} parent=11 // pred_check
          %p303 = pneg %p109
        $region22: #{_lambda_.1} parent=11 // pred_check_branch
          %305 = sbr.rel (%p303) target = $region24
        $region23: #{_lambda_.1} parent=11 // pred_region
          _
        $region24: #{_lambda_.1} parent=11 // pred_fallthru
          _
        // Predicated region
        $region25: #{_lambda_.1} parent=11 // pred_check
          %p306 = pneg %p130
        $region26: #{_lambda_.1} parent=11 // pred_check_branch
          %308 = sbr.rel (%p306) target = $region28
        $region27: #{_lambda_.1} parent=11 // pred_region
          _
        $region28: #{_lambda_.1} parent=11 // pred_fallthru
          _
        // Predicated region
        $region29: #{_lambda_.1} parent=11 // pred_check
          %p309 = pneg %p151
        $region30: #{_lambda_.1} parent=11 // pred_check_branch
          %311 = sbr.rel (%p309) target = $region32
        $region31: #{_lambda_.1} parent=11 // pred_region
          _
        $region32: #{_lambda_.1} parent=11 // pred_fallthru
          _
        // Predicated region
        $region33: #{_lambda_.1} parent=11 // pred_check
          %p312 = pneg %p172
        $region34: #{_lambda_.1} parent=11 // pred_check_branch
          %314 = sbr.rel (%p312) target = $region36
        $region35: #{_lambda_.1} parent=11 // pred_region
          _
        $region36: #{_lambda_.1} parent=11 // pred_fallthru
          _
        // Predicated region
        $region37: #{_lambda_.1} parent=11 // pred_check
          %p315 = pneg %p193
        $region38: #{_lambda_.1} parent=11 // pred_check_branch
          %317 = sbr.rel (%p315) target = $region40
        $region39: #{_lambda_.1} parent=11 // pred_region
          _
        $region40: #{_lambda_.1} parent=11 // pred_fallthru
          _
        // Predicated region
        $region41: #{_lambda_.1} parent=11 // pred_check
          %p318 = pneg %p214
        $region42: #{_lambda_.1} parent=11 // pred_check_branch
          %320 = sbr.rel (%p318) target = $region44
        $region43: #{_lambda_.1} parent=11 // pred_region
          _
        $region44: #{_lambda_.1} parent=11 // pred_fallthru
          _
        // Predicated region
        $region45: #{_lambda_.1} parent=11 // pred_check
          %p321 = pneg %p235
        $region46: #{_lambda_.1} parent=11 // pred_check_branch
          %323 = sbr.rel (%p321) target = $region48
        $region47: #{_lambda_.1} parent=11 // pred_region
          _
        $region48: #{_lambda_.1} parent=11 // pred_fallthru
          _
        // Predicated region
        $region49: #{_lambda_.1} parent=11 // pred_check
          %p324 = pneg %p256
        $region50: #{_lambda_.1} parent=11 // pred_check_branch
          %326 = sbr.rel (%p324) target = $region52
        $region51: #{_lambda_.1} parent=11 // pred_region
          _
        $region52: #{_lambda_.1} parent=11 // pred_fallthru
          _
      $region12: #{_lambda_.1} parent=5 // pred_fallthru
        _
      %p327 = scmp.lt.s32.totalorder %s20, 2
      // Predicated region
      $region53: #{_lambda_.1} parent=5 // pred_check
        %p328 = pneg %p327
      $region54: #{_lambda_.1} parent=5 // pred_check_branch
        %330 = sbr.rel (%p328) target = $region56
      $region55: #{_lambda_.1} parent=5 // pred_region
        // Predicated region
        $region57: #{_lambda_.1} parent=55 // pred_check
          %p331 = pneg %p40
        $region58: #{_lambda_.1} parent=55 // pred_check_branch
          %333 = sbr.rel (%p331) target = $region60
        $region59: #{_lambda_.1} parent=55 // pred_region
          %s334 = smul.u32 2, %s20
          %s335 = ssub.s32 3, %s334
          %p336 = scmp.lt.s32.totalorder %s335, 2
          %s337 = scalar_select %p336, %s335, 2
          %s338 = smul.u32 128, %s337
          %p339 = scmp.lt.s32.totalorder %s334, 2
          %s340 = scalar_select %p339, %s334, 2
          %s341 = smul.addr %s340, 8
          %s342 = scalar_lea.vmem %s0, %s341
          %s343 = smul.u32 2, %s20
          %s344 = ssub.s32 3, %s343
          %p345 = scmp.lt.s32.totalorder %s344, 2
          %s346 = scalar_select %p345, %s344, 2
          %s347 = smul.u32 128, %s346
        $region60: #{_lambda_.1} parent=55 // pred_fallthru
          _
      $region56: #{_lambda_.1} parent=5 // pred_fallthru
        _
      %p348 = scmp.le.s32.totalorder 1, %s20
      %p349 = scmp.lt.s32.totalorder %s20, 3
      %p350 = pnand %p348, %p349
      %p351 = pneg %p350
      // Predicated region
      $region61: #{_lambda_.1} parent=5 // pred_check
        _
      $region62: #{_lambda_.1} parent=5 // pred_check_branch
        %353 = sbr.rel (%p350) target = $region64
      $region63: #{_lambda_.1} parent=5 // pred_region
        %s354 = ssub.s32 %s20, 1
        %s355 = smul.u32 2, %s25
        %s356 = ssub.s32 3, %s355
        %p357 = scmp.lt.s32.totalorder %s356, 2
        %s358 = scalar_select %p357, %s356, 2
        %s359 = smul.u32 128, %s358
        %p360 = scmp.lt.s32.totalorder %s355, 2
        %s361 = scalar_select %p360, %s355, 2
        %s362 = smul.addr %s361, 8
        %s363 = scalar_lea.vmem %s0, %s362
        %p364 = pneg %p46
        %p365 = pneg %p43
        %p366 = pneg %p67
        %p367 = pneg %p64
        %p368 = pneg %p88
        %p369 = pneg %p85
        %p370 = pneg %p109
        %p371 = pneg %p106
        %p372 = pneg %p130
        %p373 = pneg %p127
        %p374 = pneg %p151
        %p375 = pneg %p148
        %p376 = pneg %p172
        %p377 = pneg %p169
        %p378 = pneg %p193
        %p379 = pneg %p190
        %p380 = pneg %p214
        %p381 = pneg %p211
        %p382 = pneg %p235
        %p383 = pneg %p232
        %p384 = pneg %p256
        %p385 = pneg %p253
        %p386 = pneg %p282
        %p387 = pneg %p279
        %s388 = sand.u32 %s269, 1
        %s389 = scalar_lea.sflag [#allocation3], %s388
        %s390 = sand.u32 %s269, 1
        %s391 = smul.addr %s390, 112
        %s392 = scalar_lea.vmem [#allocation2], %s391
        %s393 = smul.u32 2, %s25
        %s394 = ssub.s32 3, %s393
        %p395 = scmp.lt.s32.totalorder %s394, 2
        %s396 = scalar_select %p395, %s394, 2
        %s397 = smul.u32 128, %s396
        %p398 = scmp.lt.s32.totalorder %s393, 2
        %s399 = scalar_select %p398, %s393, 2
        %s400 = smul.addr %s399, 8
        %s401 = scalar_lea.vmem %s0, %s400
        %s402 = smul.u32 2, %s25
        %s403 = ssub.s32 3, %s402
        %p404 = scmp.lt.s32.totalorder %s403, 2
        %s405 = scalar_select %p404, %s403, 2
        %s406 = smul.u32 128, %s405
        %s407 = smul.u32 2, %s25
        %s408 = ssub.s32 3, %s407
        %p409 = scmp.lt.s32.totalorder %s408, 2
        %s410 = scalar_select %p409, %s408, 2
        %s411 = smul.u32 128, %s410
        %s412 = smul.u32 %s411, 7
        %v413 = vld [vmem:[%s401] sm:$0xff]
        %v414 = vld [vmem:[%s401 + $0x8] sm:$0xff]
        %v415 = vmax.f32 %v413, 0.0
        %v416 = vmax.f32 %v414, 0.0
        %v417 = vld [vmem:[%s1] sm:$0xff]
        %v418 = vld [vmem:[%s1 + $0x8] sm:$0xff]
        %v419 = vld [vmem:[%s2] sm:$0x1]
        %v421 = vlaneseq
        %v422 = vshrl.u32 %v421, 7
        %v423 = vsub.s32 0, %v422
        %v424 = vrot.slane %v419, %v423
        %vm426 = vcmask 130048
        %v428 = vsel %vm426, %v415, 0
        %v431 = vsel %vm426, %v416, 0
        %433 = vmatprep.subr.mxu0 0.0
        %434 = vmatpush1.msra.mxu0 %v417
        %435 = vmatprep.subr.mxu0 0.0
        %436 = vmatpush1.msra.mxu0 %v418
        %437 = vmatprep.subr.mxu0 0.0
        %438 = vmatpush1.msra.mxu0 0.0
        %439 = vmatprep.subr.mxu0 0.0
        %440 = vmatpush1.msra.mxu0 0.0
        %441 = vmatprep.subr.mxu0 0.0
        %442 = vmatpush1.msra.mxu0 0.0
        %443 = vmatprep.subr.mxu0 0.0
        %444 = vmatpush1.msra.mxu0 0.0
        %445 = vmatprep.subr.mxu0 0.0
        %446 = vmatpush1.msra.mxu0 0.0
        %447 = vmatprep.subr.mxu0 0.0
        %448 = vmatpush1.msra.mxu0 0.0
        %449 = vmatprep.subr.mxu0 0.0
        %450 = vmatpush1.msra.mxu0 0.0
        %451 = vmatprep.subr.mxu0 0.0
        %452 = vmatpush1.msra.mxu0 0.0
        %453 = vmatprep.subr.mxu0 0.0
        %454 = vmatpush1.msra.mxu0 0.0
        %455 = vmatprep.subr.mxu0 0.0
        %456 = vmatpush1.msra.mxu0 0.0
        %457 = vmatprep.subr.mxu0 0.0
        %458 = vmatpush1.msra.mxu0 0.0
        %459 = vmatprep.subr.mxu0 0.0
        %460 = vmatpush1.msra.mxu0 0.0
        %461 = vmatprep.subr.mxu0 0.0
        %462 = vmatpush1.msra.mxu0 0.0
        %463 = vmatprep.subr.mxu0 0.0
        %464 = vmatpush1.msra.mxu0 0.0
        %465 = vmatprep.subr.mxu0 0.0
        %466 = vmatpush1.msra.mxu0 0.0
        %467 = vmatprep.subr.mxu0 0.0
        %468 = vmatpush1.msra.mxu0 0.0
        %469 = vmatprep.subr.mxu0 0.0
        %470 = vmatpush1.msra.mxu0 0.0
        %471 = vmatprep.subr.mxu0 0.0
        %472 = vmatpush1.msra.mxu0 0.0
        %473 = vmatprep.subr.mxu0 0.0
        %474 = vmatpush1.msra.mxu0 0.0
        %475 = vmatprep.subr.mxu0 0.0
        %476 = vmatpush1.msra.mxu0 0.0
        %477 = vmatprep.subr.mxu0 0.0
        %478 = vmatpush1.msra.mxu0 0.0
        %479 = vmatprep.subr.mxu0 0.0
        %480 = vmatpush1.msra.mxu0 0.0
        %481 = vmatprep.subr.mxu0 0.0
        %482 = vmatpush1.msra.mxu0 0.0
        %483 = vmatprep.subr.mxu0 0.0
        %484 = vmatpush1.msra.mxu0 0.0
        %485 = vmatprep.subr.mxu0 0.0
        %486 = vmatpush1.msra.mxu0 0.0
        %487 = vmatprep.subr.mxu0 0.0
        %488 = vmatpush1.msra.mxu0 0.0
        %489 = vmatprep.subr.mxu0 0.0
        %490 = vmatpush1.msra.mxu0 0.0
        %491 = vmatprep.subr.mxu0 0.0
        %492 = vmatpush1.msra.mxu0 0.0
        %493 = vmatprep.subr.mxu0 0.0
        %494 = vmatpush1.msra.mxu0 0.0
        %495 = vmatprep.subr.mxu0 0.0
        %496 = vmatpush1.msra.mxu0 0.0
        %497 = vmatprep.mubr.f32.mxu0 0.0
        %498 = vmatmul.mubr.f32.gmra.mrb[0].mxu0 %v428
        %v499 = vpop.f32.mrb[0].mxu0
        %v500 = vadd.f32 %v424, %v499
        %v501 = vpop.f32.mrb[0].mxu0
        %502 = vmatprep.mubr.f32.mxu0 0.0
        %503 = vmatmul.mubr.f32.gmra.mrb[0].mxu0 %v431
        %v504 = vpop.f32.mrb[0].mxu0
        %v505 = vadd.f32 %v424, %v504
        %v506 = vpop.f32.mrb[0].mxu0
        %507 = vdwg.mxu0
        %v508 = vmax.f32 %v500, 0.0
        %v509 = vmax.f32 %v505, 0.0
        %v510 = vld [vmem:[%s3] sm:$0xff]
        %v511 = vld [vmem:[%s3 + $0x8] sm:$0xff]
        %v512 = vld [vmem:[%s3 + $0x10] sm:$0xff]
        %v513 = vld [vmem:[%s3 + $0x18] sm:$0xff]
        %v514 = vld [vmem:[%s4] sm:$0x1]
        %v516 = vlaneseq
        %v517 = vshrl.u32 %v516, 7
        %v518 = vsub.s32 0, %v517
        %v519 = vrot.slane %v514, %v518
        %vm521 = vcmask 261120
        %v523 = vsel %vm521, %v508, 0
        %v526 = vsel %vm521, %v509, 0
        %528 = vmatprep.subr.mxu0 0.0
        %529 = vmatpush1.msra.mxu0 %v510
        %530 = vmatprep.subr.mxu0 0.0
        %531 = vmatpush1.msra.mxu0 %v511
        %532 = vmatprep.subr.mxu0 0.0
        %533 = vmatpush1.msra.mxu0 %v512
        %534 = vmatprep.subr.mxu0 0.0
        %535 = vmatpush1.msra.mxu0 %v513
        %536 = vmatprep.subr.mxu0 0.0
        %537 = vmatpush1.msra.mxu0 0.0
        %538 = vmatprep.subr.mxu0 0.0
        %539 = vmatpush1.msra.mxu0 0.0
        %540 = vmatprep.subr.mxu0 0.0
        %541 = vmatpush1.msra.mxu0 0.0
        %542 = vmatprep.subr.mxu0 0.0
        %543 = vmatpush1.msra.mxu0 0.0
        %544 = vmatprep.subr.mxu0 0.0
        %545 = vmatpush1.msra.mxu0 0.0
        %546 = vmatprep.subr.mxu0 0.0
        %547 = vmatpush1.msra.mxu0 0.0
        %548 = vmatprep.subr.mxu0 0.0
        %549 = vmatpush1.msra.mxu0 0.0
        %550 = vmatprep.subr.mxu0 0.0
        %551 = vmatpush1.msra.mxu0 0.0
        %552 = vmatprep.subr.mxu0 0.0
        %553 = vmatpush1.msra.mxu0 0.0
        %554 = vmatprep.subr.mxu0 0.0
        %555 = vmatpush1.msra.mxu0 0.0
        %556 = vmatprep.subr.mxu0 0.0
        %557 = vmatpush1.msra.mxu0 0.0
        %558 = vmatprep.subr.mxu0 0.0
        %559 = vmatpush1.msra.mxu0 0.0
        %560 = vmatprep.subr.mxu0 0.0
        %561 = vmatpush1.msra.mxu0 0.0
        %562 = vmatprep.subr.mxu0 0.0
        %563 = vmatpush1.msra.mxu0 0.0
        %564 = vmatprep.subr.mxu0 0.0
        %565 = vmatpush1.msra.mxu0 0.0
        %566 = vmatprep.subr.mxu0 0.0
        %567 = vmatpush1.msra.mxu0 0.0
        %568 = vmatprep.subr.mxu0 0.0
        %569 = vmatpush1.msra.mxu0 0.0
        %570 = vmatprep.subr.mxu0 0.0
        %571 = vmatpush1.msra.mxu0 0.0
        %572 = vmatprep.subr.mxu0 0.0
        %573 = vmatpush1.msra.mxu0 0.0
        %574 = vmatprep.subr.mxu0 0.0
        %575 = vmatpush1.msra.mxu0 0.0
        %576 = vmatprep.subr.mxu0 0.0
        %577 = vmatpush1.msra.mxu0 0.0
        %578 = vmatprep.subr.mxu0 0.0
        %579 = vmatpush1.msra.mxu0 0.0
        %580 = vmatprep.subr.mxu0 0.0
        %581 = vmatpush1.msra.mxu0 0.0
        %582 = vmatprep.subr.mxu0 0.0
        %583 = vmatpush1.msra.mxu0 0.0
        %584 = vmatprep.subr.mxu0 0.0
        %585 = vmatpush1.msra.mxu0 0.0
        %586 = vmatprep.subr.mxu0 0.0
        %587 = vmatpush1.msra.mxu0 0.0
        %588 = vmatprep.subr.mxu0 0.0
        %589 = vmatpush1.msra.mxu0 0.0
        %590 = vmatprep.subr.mxu0 0.0
        %591 = vmatpush1.msra.mxu0 0.0
        %592 = vmatprep.mubr.f32.mxu0 0.0
        %593 = vmatmul.mubr.f32.gmra.mrb[0].mxu0 %v523
        %v594 = vpop.f32.mrb[0].mxu0
        %v595 = vadd.f32 %v519, %v594
        %v596 = vpop.f32.mrb[0].mxu0
        %597 = vmatprep.mubr.f32.mxu0 0.0
        %598 = vmatmul.mubr.f32.gmra.mrb[0].mxu0 %v526
        %v599 = vpop.f32.mrb[0].mxu0
        %v600 = vadd.f32 %v519, %v599
        %v601 = vpop.f32.mrb[0].mxu0
        %602 = vdwg.mxu0
        %v603 = vmax.f32 %v595, 0.0
        %v604 = vmax.f32 %v600, 0.0
        %v605 = vld [vmem:[%s5] sm:$0xff]
        %v606 = vld [vmem:[%s5 + $0x8] sm:$0xff]
        %v607 = vld [vmem:[%s5 + $0x10] sm:$0xff]
        %v608 = vld [vmem:[%s5 + $0x18] sm:$0xff]
        %v609 = vld [vmem:[%s5 + $0x20] sm:$0xff]
        %v610 = vld [vmem:[%s5 + $0x28] sm:$0xff]
        %v611 = vld [vmem:[%s5 + $0x30] sm:$0xff]
        %v612 = vld [vmem:[%s5 + $0x38] sm:$0xff]
        %v613 = vld [vmem:[%s5 + $0x40] sm:$0xff]
        %v614 = vld [vmem:[%s5 + $0x48] sm:$0xff]
        %v615 = vld [vmem:[%s5 + $0x50] sm:$0xff]
        %v616 = vld [vmem:[%s5 + $0x58] sm:$0xff]
        %v617 = vld [vmem:[%s5 + $0x60] sm:$0xff]
        %v618 = vld [vmem:[%s5 + $0x68] sm:$0xff]
        %v619 = vld [vmem:[%s5 + $0x70] sm:$0xff]
        %v620 = vld [vmem:[%s5 + $0x78] sm:$0xff]
        %v621 = vld [vmem:[%s5 + $0x80] sm:$0xff]
        %v622 = vld [vmem:[%s5 + $0x88] sm:$0xff]
        %v623 = vld [vmem:[%s5 + $0x90] sm:$0xff]
        %v624 = vld [vmem:[%s5 + $0x98] sm:$0xff]
        %v625 = vld [vmem:[%s5 + $0xa0] sm:$0xff]
        %v626 = vld [vmem:[%s5 + $0xa8] sm:$0xff]
        %v627 = vld [vmem:[%s5 + $0xb0] sm:$0xff]
        %v628 = vld [vmem:[%s5 + $0xb8] sm:$0xff]
        %v629 = vld [vmem:[%s5 + $0xc0] sm:$0xff]
        %v630 = vld [vmem:[%s5 + $0xc8] sm:$0xff]
        %v631 = vld [vmem:[%s5 + $0xd0] sm:$0xff]
        %v632 = vld [vmem:[%s5 + $0xd8] sm:$0xff]
        %v633 = vld [vmem:[%s5 + $0xe0] sm:$0xff]
        %v634 = vld [vmem:[%s5 + $0xe8] sm:$0xff]
        %v635 = vld [vmem:[%s5 + $0xf0] sm:$0xff]
        %v636 = vld [vmem:[%s5 + $0xf8] sm:$0xff]
        %v637 = vld [vmem:[%s6] sm:$0x3]
        %v639 = vlaneseq
        %v640 = vshrl.u32 %v639, 7
        %v641 = vsub.s32 0, %v640
        %v642 = vrot.slane %v637, %v641
        %v643 = vlaneseq
        %v644 = vshrl.u32 %v643, 7
        %v645 = vsub.s32 1, %v644
        %v646 = vrot.slane %v637, %v645
        %649 = vmatprep.subr.mxu0 %v606
        %650 = vmatpush1.msra.mxu0 %v605
        %651 = vmatprep.subr.mxu0 %v608
        %652 = vmatpush1.msra.mxu0 %v607
        %653 = vmatprep.subr.mxu0 %v610
        %654 = vmatpush1.msra.mxu0 %v609
        %655 = vmatprep.subr.mxu0 %v612
        %656 = vmatpush1.msra.mxu0 %v611
        %657 = vmatprep.subr.mxu0 %v614
        %658 = vmatpush1.msra.mxu0 %v613
        %659 = vmatprep.subr.mxu0 %v616
        %660 = vmatpush1.msra.mxu0 %v615
        %661 = vmatprep.subr.mxu0 %v618
        %662 = vmatpush1.msra.mxu0 %v617
        %663 = vmatprep.subr.mxu0 %v620
        %664 = vmatpush1.msra.mxu0 %v619
        %665 = vmatprep.subr.mxu0 %v622
        %666 = vmatpush1.msra.mxu0 %v621
        %667 = vmatprep.subr.mxu0 %v624
        %668 = vmatpush1.msra.mxu0 %v623
        %669 = vmatprep.subr.mxu0 %v626
        %670 = vmatpush1.msra.mxu0 %v625
        %671 = vmatprep.subr.mxu0 %v628
        %672 = vmatpush1.msra.mxu0 %v627
        %673 = vmatprep.subr.mxu0 %v630
        %674 = vmatpush1.msra.mxu0 %v629
        %675 = vmatprep.subr.mxu0 %v632
        %676 = vmatpush1.msra.mxu0 %v631
        %677 = vmatprep.subr.mxu0 %v634
        %678 = vmatpush1.msra.mxu0 %v633
        %679 = vmatprep.subr.mxu0 %v636
        %680 = vmatpush1.msra.mxu0 %v635
        %681 = vmatprep.subr.mxu0 0.0
        %682 = vmatpush1.msra.mxu0 0.0
        %683 = vmatprep.subr.mxu0 0.0
        %684 = vmatpush1.msra.mxu0 0.0
        %685 = vmatprep.subr.mxu0 0.0
        %686 = vmatpush1.msra.mxu0 0.0
        %687 = vmatprep.subr.mxu0 0.0
        %688 = vmatpush1.msra.mxu0 0.0
        %689 = vmatprep.subr.mxu0 0.0
        %690 = vmatpush1.msra.mxu0 0.0
        %691 = vmatprep.subr.mxu0 0.0
        %692 = vmatpush1.msra.mxu0 0.0
        %693 = vmatprep.subr.mxu0 0.0
        %694 = vmatpush1.msra.mxu0 0.0
        %695 = vmatprep.subr.mxu0 0.0
        %696 = vmatpush1.msra.mxu0 0.0
        %697 = vmatprep.subr.mxu0 0.0
        %698 = vmatpush1.msra.mxu0 0.0
        %699 = vmatprep.subr.mxu0 0.0
        %700 = vmatpush1.msra.mxu0 0.0
        %701 = vmatprep.subr.mxu0 0.0
        %702 = vmatpush1.msra.mxu0 0.0
        %703 = vmatprep.subr.mxu0 0.0
        %704 = vmatpush1.msra.mxu0 0.0
        %705 = vmatprep.subr.mxu0 0.0
        %706 = vmatpush1.msra.mxu0 0.0
        %707 = vmatprep.subr.mxu0 0.0
        %708 = vmatpush1.msra.mxu0 0.0
        %709 = vmatprep.subr.mxu0 0.0
        %710 = vmatpush1.msra.mxu0 0.0
        %711 = vmatprep.subr.mxu0 0.0
        %712 = vmatpush1.msra.mxu0 0.0
        %713 = vmatprep.mubr.f32.mxu0 0.0
        %714 = vmatmul.mubr.f32.gmra.mrb[0].mxu0 %v603
        %v715 = vpop.f32.mrb[0].mxu0
        %v716 = vadd.f32 %v642, %v715
        %v717 = vpop.f32.mrb[0].mxu0
        %v718 = vadd.f32 %v646, %v717
        %719 = vmatprep.mubr.f32.mxu0 0.0
        %720 = vmatmul.mubr.f32.gmra.mrb[0].mxu0 %v604
        %v721 = vpop.f32.mrb[0].mxu0
        %v722 = vadd.f32 %v642, %v721
        %v723 = vpop.f32.mrb[0].mxu0
        %v724 = vadd.f32 %v646, %v723
        %725 = vdwg.mxu0
        %v726 = vmax.f32 %v716, 0.0
        %v727 = vmax.f32 %v718, 0.0
        %v728 = vmax.f32 %v722, 0.0
        %v729 = vmax.f32 %v724, 0.0
        %v730 = vld [vmem:[%s7] sm:$0xff]
        %v731 = vld [vmem:[%s7 + $0x8] sm:$0xff]
        %v732 = vld [vmem:[%s7 + $0x10] sm:$0xff]
        %v733 = vld [vmem:[%s7 + $0x18] sm:$0xff]
        %v734 = vld [vmem:[%s7 + $0x20] sm:$0xff]
        %v735 = vld [vmem:[%s7 + $0x28] sm:$0xff]
        %v736 = vld [vmem:[%s7 + $0x30] sm:$0xff]
        %v737 = vld [vmem:[%s7 + $0x38] sm:$0xff]
        %v738 = vld [vmem:[%s7 + $0x40] sm:$0xff]
        %v739 = vld [vmem:[%s7 + $0x48] sm:$0xff]
        %v740 = vld [vmem:[%s7 + $0x50] sm:$0xff]
        %v741 = vld [vmem:[%s7 + $0x58] sm:$0xff]
        %v742 = vld [vmem:[%s7 + $0x60] sm:$0xff]
        %v743 = vld [vmem:[%s7 + $0x68] sm:$0xff]
        %v744 = vld [vmem:[%s7 + $0x70] sm:$0xff]
        %v745 = vld [vmem:[%s7 + $0x78] sm:$0xff]
        %v746 = vld [vmem:[%s7 + $0x80] sm:$0xff]
        %v747 = vld [vmem:[%s7 + $0x88] sm:$0xff]
        %v748 = vld [vmem:[%s7 + $0x90] sm:$0xff]
        %v749 = vld [vmem:[%s7 + $0x98] sm:$0xff]
        %v750 = vld [vmem:[%s7 + $0xa0] sm:$0xff]
        %v751 = vld [vmem:[%s7 + $0xa8] sm:$0xff]
        %v752 = vld [vmem:[%s7 + $0xb0] sm:$0xff]
        %v753 = vld [vmem:[%s7 + $0xb8] sm:$0xff]
        %v754 = vld [vmem:[%s7 + $0xc0] sm:$0xff]
        %v755 = vld [vmem:[%s7 + $0xc8] sm:$0xff]
        %v756 = vld [vmem:[%s7 + $0xd0] sm:$0xff]
        %v757 = vld [vmem:[%s7 + $0xd8] sm:$0xff]
        %v758 = vld [vmem:[%s7 + $0xe0] sm:$0xff]
        %v759 = vld [vmem:[%s7 + $0xe8] sm:$0xff]
        %v760 = vld [vmem:[%s7 + $0xf0] sm:$0xff]
        %v761 = vld [vmem:[%s7 + $0xf8] sm:$0xff]
        %v762 = vld [vmem:[%s7 + $0x100] sm:$0xff]
        %v763 = vld [vmem:[%s7 + $0x108] sm:$0xff]
        %v764 = vld [vmem:[%s7 + $0x110] sm:$0xff]
        %v765 = vld [vmem:[%s7 + $0x118] sm:$0xff]
        %v766 = vld [vmem:[%s7 + $0x120] sm:$0xff]
        %v767 = vld [vmem:[%s7 + $0x128] sm:$0xff]
        %v768 = vld [vmem:[%s7 + $0x130] sm:$0xff]
        %v769 = vld [vmem:[%s7 + $0x138] sm:$0xff]
        %v770 = vld [vmem:[%s7 + $0x140] sm:$0xff]
        %v771 = vld [vmem:[%s7 + $0x148] sm:$0xff]
        %v772 = vld [vmem:[%s7 + $0x150] sm:$0xff]
        %v773 = vld [vmem:[%s7 + $0x158] sm:$0xff]
        %v774 = vld [vmem:[%s7 + $0x160] sm:$0xff]
        %v775 = vld [vmem:[%s7 + $0x168] sm:$0xff]
        %v776 = vld [vmem:[%s7 + $0x170] sm:$0xff]
        %v777 = vld [vmem:[%s7 + $0x178] sm:$0xff]
        %v778 = vld [vmem:[%s7 + $0x180] sm:$0xff]
        %v779 = vld [vmem:[%s7 + $0x188] sm:$0xff]
        %v780 = vld [vmem:[%s7 + $0x190] sm:$0xff]
        %v781 = vld [vmem:[%s7 + $0x198] sm:$0xff]
        %v782 = vld [vmem:[%s7 + $0x1a0] sm:$0xff]
        %v783 = vld [vmem:[%s7 + $0x1a8] sm:$0xff]
        %v784 = vld [vmem:[%s7 + $0x1b0] sm:$0xff]
        %v785 = vld [vmem:[%s7 + $0x1b8] sm:$0xff]
        %v786 = vld [vmem:[%s7 + $0x1c0] sm:$0xff]
        %v787 = vld [vmem:[%s7 + $0x1c8] sm:$0xff]
        %v788 = vld [vmem:[%s7 + $0x1d0] sm:$0xff]
        %v789 = vld [vmem:[%s7 + $0x1d8] sm:$0xff]
        %v790 = vld [vmem:[%s7 + $0x1e0] sm:$0xff]
        %v791 = vld [vmem:[%s7 + $0x1e8] sm:$0xff]
        %v792 = vld [vmem:[%s7 + $0x1f0] sm:$0xff]
        %v793 = vld [vmem:[%s7 + $0x1f8] sm:$0xff]
        %v794 = vld [vmem:[%s7 + $0x200] sm:$0xff]
        %v795 = vld [vmem:[%s7 + $0x208] sm:$0xff]
        %v796 = vld [vmem:[%s7 + $0x210] sm:$0xff]
        %v797 = vld [vmem:[%s7 + $0x218] sm:$0xff]
        %v798 = vld [vmem:[%s7 + $0x220] sm:$0xff]
        %v799 = vld [vmem:[%s7 + $0x228] sm:$0xff]
        %v800 = vld [vmem:[%s7 + $0x230] sm:$0xff]
        %v801 = vld [vmem:[%s7 + $0x238] sm:$0xff]
        %v802 = vld [vmem:[%s7 + $0x240] sm:$0xff]
        %v803 = vld [vmem:[%s7 + $0x248] sm:$0xff]
        %v804 = vld [vmem:[%s7 + $0x250] sm:$0xff]
        %v805 = vld [vmem:[%s7 + $0x258] sm:$0xff]
        %v806 = vld [vmem:[%s7 + $0x260] sm:$0xff]
        %v807 = vld [vmem:[%s7 + $0x268] sm:$0xff]
        %v808 = vld [vmem:[%s7 + $0x270] sm:$0xff]
        %v809 = vld [vmem:[%s7 + $0x278] sm:$0xff]
        %v810 = vld [vmem:[%s7 + $0x280] sm:$0xff]
        %v811 = vld [vmem:[%s7 + $0x288] sm:$0xff]
        %v812 = vld [vmem:[%s7 + $0x290] sm:$0xff]
        %v813 = vld [vmem:[%s7 + $0x298] sm:$0xff]
        %v814 = vld [vmem:[%s7 + $0x2a0] sm:$0xff]
        %v815 = vld [vmem:[%s7 + $0x2a8] sm:$0xff]
        %v816 = vld [vmem:[%s7 + $0x2b0] sm:$0xff]
        %v817 = vld [vmem:[%s7 + $0x2b8] sm:$0xff]
        %v818 = vld [vmem:[%s7 + $0x2c0] sm:$0xff]
        %v819 = vld [vmem:[%s7 + $0x2c8] sm:$0xff]
        %v820 = vld [vmem:[%s7 + $0x2d0] sm:$0xff]
        %v821 = vld [vmem:[%s7 + $0x2d8] sm:$0xff]
        %v822 = vld [vmem:[%s7 + $0x2e0] sm:$0xff]
        %v823 = vld [vmem:[%s7 + $0x2e8] sm:$0xff]
        %v824 = vld [vmem:[%s7 + $0x2f0] sm:$0xff]
        %v825 = vld [vmem:[%s7 + $0x2f8] sm:$0xff]
        %v826 = vld [vmem:[%s7 + $0x300] sm:$0xff]
        %v827 = vld [vmem:[%s7 + $0x308] sm:$0xff]
        %v828 = vld [vmem:[%s7 + $0x310] sm:$0xff]
        %v829 = vld [vmem:[%s7 + $0x318] sm:$0xff]
        %v830 = vld [vmem:[%s7 + $0x320] sm:$0xff]
        %v831 = vld [vmem:[%s7 + $0x328] sm:$0xff]
        %v832 = vld [vmem:[%s7 + $0x330] sm:$0xff]
        %v833 = vld [vmem:[%s7 + $0x338] sm:$0xff]
        %v834 = vld [vmem:[%s7 + $0x340] sm:$0xff]
        %v835 = vld [vmem:[%s7 + $0x348] sm:$0xff]
        %v836 = vld [vmem:[%s7 + $0x350] sm:$0xff]
        %v837 = vld [vmem:[%s7 + $0x358] sm:$0xff]
        %v838 = vld [vmem:[%s7 + $0x360] sm:$0xff]
        %v839 = vld [vmem:[%s7 + $0x368] sm:$0xff]
        %v840 = vld [vmem:[%s7 + $0x370] sm:$0xff]
        %v841 = vld [vmem:[%s7 + $0x378] sm:$0xff]
        %v842 = vld [vmem:[%s7 + $0x380] sm:$0xff]
        %v843 = vld [vmem:[%s7 + $0x388] sm:$0xff]
        %v844 = vld [vmem:[%s7 + $0x390] sm:$0xff]
        %v845 = vld [vmem:[%s7 + $0x398] sm:$0xff]
        %v846 = vld [vmem:[%s7 + $0x3a0] sm:$0xff]
        %v847 = vld [vmem:[%s7 + $0x3a8] sm:$0xff]
        %v848 = vld [vmem:[%s7 + $0x3b0] sm:$0xff]
        %v849 = vld [vmem:[%s7 + $0x3b8] sm:$0xff]
        %v850 = vld [vmem:[%s7 + $0x3c0] sm:$0xff]
        %v851 = vld [vmem:[%s7 + $0x3c8] sm:$0xff]
        %v852 = vld [vmem:[%s7 + $0x3d0] sm:$0xff]
        %v853 = vld [vmem:[%s7 + $0x3d8] sm:$0xff]
        %v854 = vld [vmem:[%s7 + $0x3e0] sm:$0xff]
        %v855 = vld [vmem:[%s7 + $0x3e8] sm:$0xff]
        %v856 = vld [vmem:[%s7 + $0x3f0] sm:$0xff]
        %v857 = vld [vmem:[%s7 + $0x3f8] sm:$0xff]
        %v858 = vld [vmem:[%s8] sm:$0xf]
        %v860 = vlaneseq
        %v861 = vshrl.u32 %v860, 7
        %v862 = vsub.s32 0, %v861
        %v863 = vrot.slane %v858, %v862
        %v864 = vlaneseq
        %v865 = vshrl.u32 %v864, 7
        %v866 = vsub.s32 1, %v865
        %v867 = vrot.slane %v858, %v866
        %v868 = vlaneseq
        %v869 = vshrl.u32 %v868, 7
        %v870 = vsub.s32 2, %v869
        %v871 = vrot.slane %v858, %v870
        %v872 = vlaneseq
        %v873 = vshrl.u32 %v872, 7
        %v874 = vsub.s32 3, %v873
        %v875 = vrot.slane %v858, %v874
        %880 = vmatprep.subr.mxu0 %v731
        %881 = vmatpush1.msra.mxu0 %v730
        %882 = vmatprep.subr.mxu0 %v735
        %883 = vmatpush1.msra.mxu0 %v734
        %884 = vmatprep.subr.mxu0 %v739
        %885 = vmatpush1.msra.mxu0 %v738
        %886 = vmatprep.subr.mxu0 %v743
        %887 = vmatpush1.msra.mxu0 %v742
        %888 = vmatprep.subr.mxu0 %v747
        %889 = vmatpush1.msra.mxu0 %v746
        %890 = vmatprep.subr.mxu0 %v751
        %891 = vmatpush1.msra.mxu0 %v750
        %892 = vmatprep.subr.mxu0 %v755
        %893 = vmatpush1.msra.mxu0 %v754
        %894 = vmatprep.subr.mxu0 %v759
        %895 = vmatpush1.msra.mxu0 %v758
        %896 = vmatprep.subr.mxu0 %v763
        %897 = vmatpush1.msra.mxu0 %v762
        %898 = vmatprep.subr.mxu0 %v767
        %899 = vmatpush1.msra.mxu0 %v766
        %900 = vmatprep.subr.mxu0 %v771
        %901 = vmatpush1.msra.mxu0 %v770
        %902 = vmatprep.subr.mxu0 %v775
        %903 = vmatpush1.msra.mxu0 %v774
        %904 = vmatprep.subr.mxu0 %v779
        %905 = vmatpush1.msra.mxu0 %v778
        %906 = vmatprep.subr.mxu0 %v783
        %907 = vmatpush1.msra.mxu0 %v782
        %908 = vmatprep.subr.mxu0 %v787
        %909 = vmatpush1.msra.mxu0 %v786
        %910 = vmatprep.subr.mxu0 %v791
        %911 = vmatpush1.msra.mxu0 %v790
        %912 = vmatprep.subr.mxu0 %v795
        %913 = vmatpush1.msra.mxu0 %v794
        %914 = vmatprep.subr.mxu0 %v799
        %915 = vmatpush1.msra.mxu0 %v798
        %916 = vmatprep.subr.mxu0 %v803
        %917 = vmatpush1.msra.mxu0 %v802
        %918 = vmatprep.subr.mxu0 %v807
        %919 = vmatpush1.msra.mxu0 %v806
        %920 = vmatprep.subr.mxu0 %v811
        %921 = vmatpush1.msra.mxu0 %v810
        %922 = vmatprep.subr.mxu0 %v815
        %923 = vmatpush1.msra.mxu0 %v814
        %924 = vmatprep.subr.mxu0 %v819
        %925 = vmatpush1.msra.mxu0 %v818
        %926 = vmatprep.subr.mxu0 %v823
        %927 = vmatpush1.msra.mxu0 %v822
        %928 = vmatprep.subr.mxu0 %v827
        %929 = vmatpush1.msra.mxu0 %v826
        %930 = vmatprep.subr.mxu0 %v831
        %931 = vmatpush1.msra.mxu0 %v830
        %932 = vmatprep.subr.mxu0 %v835
        %933 = vmatpush1.msra.mxu0 %v834
        %934 = vmatprep.subr.mxu0 %v839
        %935 = vmatpush1.msra.mxu0 %v838
        %936 = vmatprep.subr.mxu0 %v843
        %937 = vmatpush1.msra.mxu0 %v842
        %938 = vmatprep.subr.mxu0 %v847
        %939 = vmatpush1.msra.mxu0 %v846
        %940 = vmatprep.subr.mxu0 %v851
        %941 = vmatpush1.msra.mxu0 %v850
        %942 = vmatprep.subr.mxu0 %v855
        %943 = vmatpush1.msra.mxu0 %v854
        %944 = vmatprep.mubr.f32.mxu0 %v727
        %945 = vmatmul.mubr.f32.gmra.mrb[0].mxu0 %v726
        %v946 = vpop.f32.mrb[0].mxu0
        %v947 = vadd.f32 %v863, %v946
        %v948 = vpop.f32.mrb[0].mxu0
        %v949 = vadd.f32 %v867, %v948
        %950 = vmatprep.mubr.f32.mxu0 %v729
        %951 = vmatmul.mubr.f32.gmra.mrb[0].mxu0 %v728
        %v952 = vpop.f32.mrb[0].mxu0
        %v953 = vadd.f32 %v863, %v952
        %v954 = vpop.f32.mrb[0].mxu0
        %v955 = vadd.f32 %v867, %v954
        %956 = vdwg.mxu0
        %957 = vmatprep.subr.mxu0 %v733
        %958 = vmatpush1.msra.mxu0 %v732
        %959 = vmatprep.subr.mxu0 %v737
        %960 = vmatpush1.msra.mxu0 %v736
        %961 = vmatprep.subr.mxu0 %v741
        %962 = vmatpush1.msra.mxu0 %v740
        %963 = vmatprep.subr.mxu0 %v745
        %964 = vmatpush1.msra.mxu0 %v744
        %965 = vmatprep.subr.mxu0 %v749
        %966 = vmatpush1.msra.mxu0 %v748
        %967 = vmatprep.subr.mxu0 %v753
        %968 = vmatpush1.msra.mxu0 %v752
        %969 = vmatprep.subr.mxu0 %v757
        %970 = vmatpush1.msra.mxu0 %v756
        %971 = vmatprep.subr.mxu0 %v761
        %972 = vmatpush1.msra.mxu0 %v760
        %973 = vmatprep.subr.mxu0 %v765
        %974 = vmatpush1.msra.mxu0 %v764
        %975 = vmatprep.subr.mxu0 %v769
        %976 = vmatpush1.msra.mxu0 %v768
        %977 = vmatprep.subr.mxu0 %v773
        %978 = vmatpush1.msra.mxu0 %v772
        %979 = vmatprep.subr.mxu0 %v777
        %980 = vmatpush1.msra.mxu0 %v776
        %981 = vmatprep.subr.mxu0 %v781
        %982 = vmatpush1.msra.mxu0 %v780
        %983 = vmatprep.subr.mxu0 %v785
        %984 = vmatpush1.msra.mxu0 %v784
        %985 = vmatprep.subr.mxu0 %v789
        %986 = vmatpush1.msra.mxu0 %v788
        %987 = vmatprep.subr.mxu0 %v793
        %988 = vmatpush1.msra.mxu0 %v792
        %989 = vmatprep.subr.mxu0 %v797
        %990 = vmatpush1.msra.mxu0 %v796
        %991 = vmatprep.subr.mxu0 %v801
        %992 = vmatpush1.msra.mxu0 %v800
        %993 = vmatprep.subr.mxu0 %v805
        %994 = vmatpush1.msra.mxu0 %v804
        %995 = vmatprep.subr.mxu0 %v809
        %996 = vmatpush1.msra.mxu0 %v808
        %997 = vmatprep.subr.mxu0 %v813
        %998 = vmatpush1.msra.mxu0 %v812
        %999 = vmatprep.subr.mxu0 %v817
        %1000 = vmatpush1.msra.mxu0 %v816
        %1001 = vmatprep.subr.mxu0 %v821
        %1002 = vmatpush1.msra.mxu0 %v820
        %1003 = vmatprep.subr.mxu0 %v825
        %1004 = vmatpush1.msra.mxu0 %v824
        %1005 = vmatprep.subr.mxu0 %v829
        %1006 = vmatpush1.msra.mxu0 %v828
        %1007 = vmatprep.subr.mxu0 %v833
        %1008 = vmatpush1.msra.mxu0 %v832
        %1009 = vmatprep.subr.mxu0 %v837
        %1010 = vmatpush1.msra.mxu0 %v836
        %1011 = vmatprep.subr.mxu0 %v841
        %1012 = vmatpush1.msra.mxu0 %v840
        %1013 = vmatprep.subr.mxu0 %v845
        %1014 = vmatpush1.msra.mxu0 %v844
        %1015 = vmatprep.subr.mxu0 %v849
        %1016 = vmatpush1.msra.mxu0 %v848
        %1017 = vmatprep.subr.mxu0 %v853
        %1018 = vmatpush1.msra.mxu0 %v852
        %1019 = vmatprep.subr.mxu0 %v857
        %1020 = vmatpush1.msra.mxu0 %v856
        %1021 = vmatprep.mubr.f32.mxu0 %v727
        %1022 = vmatmul.mubr.f32.gmra.mrb[0].mxu0 %v726
        %v1023 = vpop.f32.mrb[0].mxu0
        %v1024 = vadd.f32 %v871, %v1023
        %v1025 = vpop.f32.mrb[0].mxu0
        %v1026 = vadd.f32 %v875, %v1025
        %1027 = vmatprep.mubr.f32.mxu0 %v729
        %1028 = vmatmul.mubr.f32.gmra.mrb[0].mxu0 %v728
        %v1029 = vpop.f32.mrb[0].mxu0
        %v1030 = vadd.f32 %v871, %v1029
        %v1031 = vpop.f32.mrb[0].mxu0
        %v1032 = vadd.f32 %v875, %v1031
        %1033 = vdwg.mxu0
        %v1034 = vmax.f32 %v947, 0.0
        %v1035 = vmax.f32 %v949, 0.0
        %v1036 = vmax.f32 %v1024, 0.0
        %v1037 = vmax.f32 %v1026, 0.0
        %v1038 = vmax.f32 %v953, 0.0
        %v1039 = vmax.f32 %v955, 0.0
        %v1040 = vmax.f32 %v1030, 0.0
        %v1041 = vmax.f32 %v1032, 0.0
        %v1042 = vld [vmem:[%s9] sm:$0xff]
        %v1043 = vld [vmem:[%s9 + $0x8] sm:$0xff]
        %v1044 = vld [vmem:[%s9 + $0x10] sm:$0xff]
        %v1045 = vld [vmem:[%s9 + $0x18] sm:$0xff]
        %v1046 = vld [vmem:[%s9 + $0x20] sm:$0xff]
        %v1047 = vld [vmem:[%s9 + $0x28] sm:$0xff]
        %v1048 = vld [vmem:[%s9 + $0x30] sm:$0xff]
        %v1049 = vld [vmem:[%s9 + $0x38] sm:$0xff]
        %v1050 = vld [vmem:[%s9 + $0x40] sm:$0xff]
        %v1051 = vld [vmem:[%s9 + $0x48] sm:$0xff]
        %v1052 = vld [vmem:[%s9 + $0x50] sm:$0xff]
        %v1053 = vld [vmem:[%s9 + $0x58] sm:$0xff]
        %v1054 = vld [vmem:[%s9 + $0x60] sm:$0xff]
        %v1055 = vld [vmem:[%s9 + $0x68] sm:$0xff]
        %v1056 = vld [vmem:[%s9 + $0x70] sm:$0xff]
        %v1057 = vld [vmem:[%s9 + $0x78] sm:$0xff]
        %v1058 = vld [vmem:[%s9 + $0x80] sm:$0xff]
        %v1059 = vld [vmem:[%s9 + $0x88] sm:$0xff]
        %v1060 = vld [vmem:[%s9 + $0x90] sm:$0xff]
        %v1061 = vld [vmem:[%s9 + $0x98] sm:$0xff]
        %v1062 = vld [vmem:[%s9 + $0xa0] sm:$0xff]
        %v1063 = vld [vmem:[%s9 + $0xa8] sm:$0xff]
        %v1064 = vld [vmem:[%s9 + $0xb0] sm:$0xff]
        %v1065 = vld [vmem:[%s9 + $0xb8] sm:$0xff]
        %v1066 = vld [vmem:[%s9 + $0xc0] sm:$0xff]
        %v1067 = vld [vmem:[%s9 + $0xc8] sm:$0xff]
        %v1068 = vld [vmem:[%s9 + $0xd0] sm:$0xff]
        %v1069 = vld [vmem:[%s9 + $0xd8] sm:$0xff]
        %v1070 = vld [vmem:[%s9 + $0xe0] sm:$0xff]
        %v1071 = vld [vmem:[%s9 + $0xe8] sm:$0xff]
        %v1072 = vld [vmem:[%s9 + $0xf0] sm:$0xff]
        %v1073 = vld [vmem:[%s9 + $0xf8] sm:$0xff]
        %v1074 = vld [vmem:[%s9 + $0x100] sm:$0xff]
        %v1075 = vld [vmem:[%s9 + $0x108] sm:$0xff]
        %v1076 = vld [vmem:[%s9 + $0x110] sm:$0xff]
        %v1077 = vld [vmem:[%s9 + $0x118] sm:$0xff]
        %v1078 = vld [vmem:[%s9 + $0x120] sm:$0xff]
        %v1079 = vld [vmem:[%s9 + $0x128] sm:$0xff]
        %v1080 = vld [vmem:[%s9 + $0x130] sm:$0xff]
        %v1081 = vld [vmem:[%s9 + $0x138] sm:$0xff]
        %v1082 = vld [vmem:[%s9 + $0x140] sm:$0xff]
        %v1083 = vld [vmem:[%s9 + $0x148] sm:$0xff]
        %v1084 = vld [vmem:[%s9 + $0x150] sm:$0xff]
        %v1085 = vld [vmem:[%s9 + $0x158] sm:$0xff]
        %v1086 = vld [vmem:[%s9 + $0x160] sm:$0xff]
        %v1087 = vld [vmem:[%s9 + $0x168] sm:$0xff]
        %v1088 = vld [vmem:[%s9 + $0x170] sm:$0xff]
        %v1089 = vld [vmem:[%s9 + $0x178] sm:$0xff]
        %v1090 = vld [vmem:[%s9 + $0x180] sm:$0xff]
        %v1091 = vld [vmem:[%s9 + $0x188] sm:$0xff]
        %v1092 = vld [vmem:[%s9 + $0x190] sm:$0xff]
        %v1093 = vld [vmem:[%s9 + $0x198] sm:$0xff]
        %v1094 = vld [vmem:[%s9 + $0x1a0] sm:$0xff]
        %v1095 = vld [vmem:[%s9 + $0x1a8] sm:$0xff]
        %v1096 = vld [vmem:[%s9 + $0x1b0] sm:$0xff]
        %v1097 = vld [vmem:[%s9 + $0x1b8] sm:$0xff]
        %v1098 = vld [vmem:[%s9 + $0x1c0] sm:$0xff]
        %v1099 = vld [vmem:[%s9 + $0x1c8] sm:$0xff]
        %v1100 = vld [vmem:[%s9 + $0x1d0] sm:$0xff]
        %v1101 = vld [vmem:[%s9 + $0x1d8] sm:$0xff]
        %v1102 = vld [vmem:[%s9 + $0x1e0] sm:$0xff]
        %v1103 = vld [vmem:[%s9 + $0x1e8] sm:$0xff]
        %v1104 = vld [vmem:[%s9 + $0x1f0] sm:$0xff]
        %v1105 = vld [vmem:[%s9 + $0x1f8] sm:$0xff]
        %v1106 = vld [vmem:[%s9 + $0x200] sm:$0xff]
        %v1107 = vld [vmem:[%s9 + $0x208] sm:$0xff]
        %v1108 = vld [vmem:[%s9 + $0x210] sm:$0xff]
        %v1109 = vld [vmem:[%s9 + $0x218] sm:$0xff]
        %v1110 = vld [vmem:[%s9 + $0x220] sm:$0xff]
        %v1111 = vld [vmem:[%s9 + $0x228] sm:$0xff]
        %v1112 = vld [vmem:[%s9 + $0x230] sm:$0xff]
        %v1113 = vld [vmem:[%s9 + $0x238] sm:$0xff]
        %v1114 = vld [vmem:[%s9 + $0x240] sm:$0xff]
        %v1115 = vld [vmem:[%s9 + $0x248] sm:$0xff]
        %v1116 = vld [vmem:[%s9 + $0x250] sm:$0xff]
        %v1117 = vld [vmem:[%s9 + $0x258] sm:$0xff]
        %v1118 = vld [vmem:[%s9 + $0x260] sm:$0xff]
        %v1119 = vld [vmem:[%s9 + $0x268] sm:$0xff]
        %v1120 = vld [vmem:[%s9 + $0x270] sm:$0xff]
        %v1121 = vld [vmem:[%s9 + $0x278] sm:$0xff]
        %v1122 = vld [vmem:[%s9 + $0x280] sm:$0xff]
        %v1123 = vld [vmem:[%s9 + $0x288] sm:$0xff]
        %v1124 = vld [vmem:[%s9 + $0x290] sm:$0xff]
        %v1125 = vld [vmem:[%s9 + $0x298] sm:$0xff]
        %v1126 = vld [vmem:[%s9 + $0x2a0] sm:$0xff]
        %v1127 = vld [vmem:[%s9 + $0x2a8] sm:$0xff]
        %v1128 = vld [vmem:[%s9 + $0x2b0] sm:$0xff]
        %v1129 = vld [vmem:[%s9 + $0x2b8] sm:$0xff]
        %v1130 = vld [vmem:[%s9 + $0x2c0] sm:$0xff]
        %v1131 = vld [vmem:[%s9 + $0x2c8] sm:$0xff]
        %v1132 = vld [vmem:[%s9 + $0x2d0] sm:$0xff]
        %v1133 = vld [vmem:[%s9 + $0x2d8] sm:$0xff]
        %v1134 = vld [vmem:[%s9 + $0x2e0] sm:$0xff]
        %v1135 = vld [vmem:[%s9 + $0x2e8] sm:$0xff]
        %v1136 = vld [vmem:[%s9 + $0x2f0] sm:$0xff]
        %v1137 = vld [vmem:[%s9 + $0x2f8] sm:$0xff]
        %v1138 = vld [vmem:[%s9 + $0x300] sm:$0xff]
        %v1139 = vld [vmem:[%s9 + $0x308] sm:$0xff]
        %v1140 = vld [vmem:[%s9 + $0x310] sm:$0xff]
        %v1141 = vld [vmem:[%s9 + $0x318] sm:$0xff]
        %v1142 = vld [vmem:[%s9 + $0x320] sm:$0xff]
        %v1143 = vld [vmem:[%s9 + $0x328] sm:$0xff]
        %v1144 = vld [vmem:[%s9 + $0x330] sm:$0xff]
        %v1145 = vld [vmem:[%s9 + $0x338] sm:$0xff]
        %v1146 = vld [vmem:[%s9 + $0x340] sm:$0xff]
        %v1147 = vld [vmem:[%s9 + $0x348] sm:$0xff]
        %v1148 = vld [vmem:[%s9 + $0x350] sm:$0xff]
        %v1149 = vld [vmem:[%s9 + $0x358] sm:$0xff]
        %v1150 = vld [vmem:[%s9 + $0x360] sm:$0xff]
        %v1151 = vld [vmem:[%s9 + $0x368] sm:$0xff]
        %v1152 = vld [vmem:[%s9 + $0x370] sm:$0xff]
        %v1153 = vld [vmem:[%s9 + $0x378] sm:$0xff]
        %v1154 = vld [vmem:[%s9 + $0x380] sm:$0xff]
        %v1155 = vld [vmem:[%s9 + $0x388] sm:$0xff]
        %v1156 = vld [vmem:[%s9 + $0x390] sm:$0xff]
        %v1157 = vld [vmem:[%s9 + $0x398] sm:$0xff]
        %v1158 = vld [vmem:[%s9 + $0x3a0] sm:$0xff]
        %v1159 = vld [vmem:[%s9 + $0x3a8] sm:$0xff]
        %v1160 = vld [vmem:[%s9 + $0x3b0] sm:$0xff]
        %v1161 = vld [vmem:[%s9 + $0x3b8] sm:$0xff]
        %v1162 = vld [vmem:[%s9 + $0x3c0] sm:$0xff]
        %v1163 = vld [vmem:[%s9 + $0x3c8] sm:$0xff]
        %v1164 = vld [vmem:[%s9 + $0x3d0] sm:$0xff]
        %v1165 = vld [vmem:[%s9 + $0x3d8] sm:$0xff]
        %v1166 = vld [vmem:[%s9 + $0x3e0] sm:$0xff]
        %v1167 = vld [vmem:[%s9 + $0x3e8] sm:$0xff]
        %v1168 = vld [vmem:[%s9 + $0x3f0] sm:$0xff]
        %v1169 = vld [vmem:[%s9 + $0x3f8] sm:$0xff]
        %v1170 = vld [vmem:[%s9 + $0x400] sm:$0xff]
        %v1171 = vld [vmem:[%s9 + $0x408] sm:$0xff]
        %v1172 = vld [vmem:[%s9 + $0x410] sm:$0xff]
        %v1173 = vld [vmem:[%s9 + $0x418] sm:$0xff]
        %v1174 = vld [vmem:[%s9 + $0x420] sm:$0xff]
        %v1175 = vld [vmem:[%s9 + $0x428] sm:$0xff]
        %v1176 = vld [vmem:[%s9 + $0x430] sm:$0xff]
        %v1177 = vld [vmem:[%s9 + $0x438] sm:$0xff]
        %v1178 = vld [vmem:[%s9 + $0x440] sm:$0xff]
        %v1179 = vld [vmem:[%s9 + $0x448] sm:$0xff]
        %v1180 = vld [vmem:[%s9 + $0x450] sm:$0xff]
        %v1181 = vld [vmem:[%s9 + $0x458] sm:$0xff]
        %v1182 = vld [vmem:[%s9 + $0x460] sm:$0xff]
        %v1183 = vld [vmem:[%s9 + $0x468] sm:$0xff]
        %v1184 = vld [vmem:[%s9 + $0x470] sm:$0xff]
        %v1185 = vld [vmem:[%s9 + $0x478] sm:$0xff]
        %v1186 = vld [vmem:[%s9 + $0x480] sm:$0xff]
        %v1187 = vld [vmem:[%s9 + $0x488] sm:$0xff]
        %v1188 = vld [vmem:[%s9 + $0x490] sm:$0xff]
        %v1189 = vld [vmem:[%s9 + $0x498] sm:$0xff]
        %v1190 = vld [vmem:[%s9 + $0x4a0] sm:$0xff]
        %v1191 = vld [vmem:[%s9 + $0x4a8] sm:$0xff]
        %v1192 = vld [vmem:[%s9 + $0x4b0] sm:$0xff]
        %v1193 = vld [vmem:[%s9 + $0x4b8] sm:$0xff]
        %v1194 = vld [vmem:[%s9 + $0x4c0] sm:$0xff]
        %v1195 = vld [vmem:[%s9 + $0x4c8] sm:$0xff]
        %v1196 = vld [vmem:[%s9 + $0x4d0] sm:$0xff]
        %v1197 = vld [vmem:[%s9 + $0x4d8] sm:$0xff]
        %v1198 = vld [vmem:[%s9 + $0x4e0] sm:$0xff]
        %v1199 = vld [vmem:[%s9 + $0x4e8] sm:$0xff]
        %v1200 = vld [vmem:[%s9 + $0x4f0] sm:$0xff]
        %v1201 = vld [vmem:[%s9 + $0x4f8] sm:$0xff]
        %v1202 = vld [vmem:[%s9 + $0x500] sm:$0xff]
        %v1203 = vld [vmem:[%s9 + $0x508] sm:$0xff]
        %v1204 = vld [vmem:[%s9 + $0x510] sm:$0xff]
        %v1205 = vld [vmem:[%s9 + $0x518] sm:$0xff]
        %v1206 = vld [vmem:[%s9 + $0x520] sm:$0xff]
        %v1207 = vld [vmem:[%s9 + $0x528] sm:$0xff]
        %v1208 = vld [vmem:[%s9 + $0x530] sm:$0xff]
        %v1209 = vld [vmem:[%s9 + $0x538] sm:$0xff]
        %v1210 = vld [vmem:[%s9 + $0x540] sm:$0xff]
        %v1211 = vld [vmem:[%s9 + $0x548] sm:$0xff]
        %v1212 = vld [vmem:[%s9 + $0x550] sm:$0xff]
        %v1213 = vld [vmem:[%s9 + $0x558] sm:$0xff]
        %v1214 = vld [vmem:[%s9 + $0x560] sm:$0xff]
        %v1215 = vld [vmem:[%s9 + $0x568] sm:$0xff]
        %v1216 = vld [vmem:[%s9 + $0x570] sm:$0xff]
        %v1217 = vld [vmem:[%s9 + $0x578] sm:$0xff]
        %v1218 = vld [vmem:[%s9 + $0x580] sm:$0xff]
        %v1219 = vld [vmem:[%s9 + $0x588] sm:$0xff]
        %v1220 = vld [vmem:[%s9 + $0x590] sm:$0xff]
        %v1221 = vld [vmem:[%s9 + $0x598] sm:$0xff]
        %v1222 = vld [vmem:[%s9 + $0x5a0] sm:$0xff]
        %v1223 = vld [vmem:[%s9 + $0x5a8] sm:$0xff]
        %v1224 = vld [vmem:[%s9 + $0x5b0] sm:$0xff]
        %v1225 = vld [vmem:[%s9 + $0x5b8] sm:$0xff]
        %v1226 = vld [vmem:[%s9 + $0x5c0] sm:$0xff]
        %v1227 = vld [vmem:[%s9 + $0x5c8] sm:$0xff]
        %v1228 = vld [vmem:[%s9 + $0x5d0] sm:$0xff]
        %v1229 = vld [vmem:[%s9 + $0x5d8] sm:$0xff]
        %v1230 = vld [vmem:[%s9 + $0x5e0] sm:$0xff]
        %v1231 = vld [vmem:[%s9 + $0x5e8] sm:$0xff]
        %v1232 = vld [vmem:[%s9 + $0x5f0] sm:$0xff]
        %v1233 = vld [vmem:[%s9 + $0x5f8] sm:$0xff]
        %v1234 = vld [vmem:[%s9 + $0x600] sm:$0xff]
        %v1235 = vld [vmem:[%s9 + $0x608] sm:$0xff]
        %v1236 = vld [vmem:[%s9 + $0x610] sm:$0xff]
        %v1237 = vld [vmem:[%s9 + $0x618] sm:$0xff]
        %v1238 = vld [vmem:[%s9 + $0x620] sm:$0xff]
        %v1239 = vld [vmem:[%s9 + $0x628] sm:$0xff]
        %v1240 = vld [vmem:[%s9 + $0x630] sm:$0xff]
        %v1241 = vld [vmem:[%s9 + $0x638] sm:$0xff]
        %v1242 = vld [vmem:[%s9 + $0x640] sm:$0xff]
        %v1243 = vld [vmem:[%s9 + $0x648] sm:$0xff]
        %v1244 = vld [vmem:[%s9 + $0x650] sm:$0xff]
        %v1245 = vld [vmem:[%s9 + $0x658] sm:$0xff]
        %v1246 = vld [vmem:[%s9 + $0x660] sm:$0xff]
        %v1247 = vld [vmem:[%s9 + $0x668] sm:$0xff]
        %v1248 = vld [vmem:[%s9 + $0x670] sm:$0xff]
        %v1249 = vld [vmem:[%s9 + $0x678] sm:$0xff]
        %v1250 = vld [vmem:[%s9 + $0x680] sm:$0xff]
        %v1251 = vld [vmem:[%s9 + $0x688] sm:$0xff]
        %v1252 = vld [vmem:[%s9 + $0x690] sm:$0xff]
        %v1253 = vld [vmem:[%s9 + $0x698] sm:$0xff]
        %v1254 = vld [vmem:[%s9 + $0x6a0] sm:$0xff]
        %v1255 = vld [vmem:[%s9 + $0x6a8] sm:$0xff]
        %v1256 = vld [vmem:[%s9 + $0x6b0] sm:$0xff]
        %v1257 = vld [vmem:[%s9 + $0x6b8] sm:$0xff]
        %v1258 = vld [vmem:[%s9 + $0x6c0] sm:$0xff]
        %v1259 = vld [vmem:[%s9 + $0x6c8] sm:$0xff]
        %v1260 = vld [vmem:[%s9 + $0x6d0] sm:$0xff]
        %v1261 = vld [vmem:[%s9 + $0x6d8] sm:$0xff]
        %v1262 = vld [vmem:[%s9 + $0x6e0] sm:$0xff]
        %v1263 = vld [vmem:[%s9 + $0x6e8] sm:$0xff]
        %v1264 = vld [vmem:[%s9 + $0x6f0] sm:$0xff]
        %v1265 = vld [vmem:[%s9 + $0x6f8] sm:$0xff]
        %v1266 = vld [vmem:[%s9 + $0x700] sm:$0xff]
        %v1267 = vld [vmem:[%s9 + $0x708] sm:$0xff]
        %v1268 = vld [vmem:[%s9 + $0x710] sm:$0xff]
        %v1269 = vld [vmem:[%s9 + $0x718] sm:$0xff]
        %v1270 = vld [vmem:[%s9 + $0x720] sm:$0xff]
        %v1271 = vld [vmem:[%s9 + $0x728] sm:$0xff]
        %v1272 = vld [vmem:[%s9 + $0x730] sm:$0xff]
        %v1273 = vld [vmem:[%s9 + $0x738] sm:$0xff]
        %v1274 = vld [vmem:[%s9 + $0x740] sm:$0xff]
        %v1275 = vld [vmem:[%s9 + $0x748] sm:$0xff]
        %v1276 = vld [vmem:[%s9 + $0x750] sm:$0xff]
        %v1277 = vld [vmem:[%s9 + $0x758] sm:$0xff]
        %v1278 = vld [vmem:[%s9 + $0x760] sm:$0xff]
        %v1279 = vld [vmem:[%s9 + $0x768] sm:$0xff]
        %v1280 = vld [vmem:[%s9 + $0x770] sm:$0xff]
        %v1281 = vld [vmem:[%s9 + $0x778] sm:$0xff]
        %v1282 = vld [vmem:[%s9 + $0x780] sm:$0xff]
        %v1283 = vld [vmem:[%s9 + $0x788] sm:$0xff]
        %v1284 = vld [vmem:[%s9 + $0x790] sm:$0xff]
        %v1285 = vld [vmem:[%s9 + $0x798] sm:$0xff]
        %v1286 = vld [vmem:[%s9 + $0x7a0] sm:$0xff]
        %v1287 = vld [vmem:[%s9 + $0x7a8] sm:$0xff]
        %v1288 = vld [vmem:[%s9 + $0x7b0] sm:$0xff]
        %v1289 = vld [vmem:[%s9 + $0x7b8] sm:$0xff]
        %v1290 = vld [vmem:[%s9 + $0x7c0] sm:$0xff]
        %v1291 = vld [vmem:[%s9 + $0x7c8] sm:$0xff]
        %v1292 = vld [vmem:[%s9 + $0x7d0] sm:$0xff]
        %v1293 = vld [vmem:[%s9 + $0x7d8] sm:$0xff]
        %v1294 = vld [vmem:[%s9 + $0x7e0] sm:$0xff]
        %v1295 = vld [vmem:[%s9 + $0x7e8] sm:$0xff]
        %v1296 = vld [vmem:[%s9 + $0x7f0] sm:$0xff]
        %v1297 = vld [vmem:[%s9 + $0x7f8] sm:$0xff]
        %v1298 = vld [vmem:[%s9 + $0x800] sm:$0xff]
        %v1299 = vld [vmem:[%s9 + $0x808] sm:$0xff]
        %v1300 = vld [vmem:[%s9 + $0x810] sm:$0xff]
        %v1301 = vld [vmem:[%s9 + $0x818] sm:$0xff]
        %v1302 = vld [vmem:[%s9 + $0x820] sm:$0xff]
        %v1303 = vld [vmem:[%s9 + $0x828] sm:$0xff]
        %v1304 = vld [vmem:[%s9 + $0x830] sm:$0xff]
        %v1305 = vld [vmem:[%s9 + $0x838] sm:$0xff]
        %v1306 = vld [vmem:[%s9 + $0x840] sm:$0xff]
        %v1307 = vld [vmem:[%s9 + $0x848] sm:$0xff]
        %v1308 = vld [vmem:[%s9 + $0x850] sm:$0xff]
        %v1309 = vld [vmem:[%s9 + $0x858] sm:$0xff]
        %v1310 = vld [vmem:[%s9 + $0x860] sm:$0xff]
        %v1311 = vld [vmem:[%s9 + $0x868] sm:$0xff]
        %v1312 = vld [vmem:[%s9 + $0x870] sm:$0xff]
        %v1313 = vld [vmem:[%s9 + $0x878] sm:$0xff]
        %v1314 = vld [vmem:[%s9 + $0x880] sm:$0xff]
        %v1315 = vld [vmem:[%s9 + $0x888] sm:$0xff]
        %v1316 = vld [vmem:[%s9 + $0x890] sm:$0xff]
        %v1317 = vld [vmem:[%s9 + $0x898] sm:$0xff]
        %v1318 = vld [vmem:[%s9 + $0x8a0] sm:$0xff]
        %v1319 = vld [vmem:[%s9 + $0x8a8] sm:$0xff]
        %v1320 = vld [vmem:[%s9 + $0x8b0] sm:$0xff]
        %v1321 = vld [vmem:[%s9 + $0x8b8] sm:$0xff]
        %v1322 = vld [vmem:[%s9 + $0x8c0] sm:$0xff]
        %v1323 = vld [vmem:[%s9 + $0x8c8] sm:$0xff]
        %v1324 = vld [vmem:[%s9 + $0x8d0] sm:$0xff]
        %v1325 = vld [vmem:[%s9 + $0x8d8] sm:$0xff]
        %v1326 = vld [vmem:[%s9 + $0x8e0] sm:$0xff]
        %v1327 = vld [vmem:[%s9 + $0x8e8] sm:$0xff]
        %v1328 = vld [vmem:[%s9 + $0x8f0] sm:$0xff]
        %v1329 = vld [vmem:[%s9 + $0x8f8] sm:$0xff]
        %v1330 = vld [vmem:[%s9 + $0x900] sm:$0xff]
        %v1331 = vld [vmem:[%s9 + $0x908] sm:$0xff]
        %v1332 = vld [vmem:[%s9 + $0x910] sm:$0xff]
        %v1333 = vld [vmem:[%s9 + $0x918] sm:$0xff]
        %v1334 = vld [vmem:[%s9 + $0x920] sm:$0xff]
        %v1335 = vld [vmem:[%s9 + $0x928] sm:$0xff]
        %v1336 = vld [vmem:[%s9 + $0x930] sm:$0xff]
        %v1337 = vld [vmem:[%s9 + $0x938] sm:$0xff]
        %v1338 = vld [vmem:[%s9 + $0x940] sm:$0xff]
        %v1339 = vld [vmem:[%s9 + $0x948] sm:$0xff]
        %v1340 = vld [vmem:[%s9 + $0x950] sm:$0xff]
        %v1341 = vld [vmem:[%s9 + $0x958] sm:$0xff]
        %v1342 = vld [vmem:[%s9 + $0x960] sm:$0xff]
        %v1343 = vld [vmem:[%s9 + $0x968] sm:$0xff]
        %v1344 = vld [vmem:[%s9 + $0x970] sm:$0xff]
        %v1345 = vld [vmem:[%s9 + $0x978] sm:$0xff]
        %v1346 = vld [vmem:[%s9 + $0x980] sm:$0xff]
        %v1347 = vld [vmem:[%s9 + $0x988] sm:$0xff]
        %v1348 = vld [vmem:[%s9 + $0x990] sm:$0xff]
        %v1349 = vld [vmem:[%s9 + $0x998] sm:$0xff]
        %v1350 = vld [vmem:[%s9 + $0x9a0] sm:$0xff]
        %v1351 = vld [vmem:[%s9 + $0x9a8] sm:$0xff]
        %v1352 = vld [vmem:[%s9 + $0x9b0] sm:$0xff]
        %v1353 = vld [vmem:[%s9 + $0x9b8] sm:$0xff]
        %v1354 = vld [vmem:[%s9 + $0x9c0] sm:$0xff]
        %v1355 = vld [vmem:[%s9 + $0x9c8] sm:$0xff]
        %v1356 = vld [vmem:[%s9 + $0x9d0] sm:$0xff]
        %v1357 = vld [vmem:[%s9 + $0x9d8] sm:$0xff]
        %v1358 = vld [vmem:[%s9 + $0x9e0] sm:$0xff]
        %v1359 = vld [vmem:[%s9 + $0x9e8] sm:$0xff]
        %v1360 = vld [vmem:[%s9 + $0x9f0] sm:$0xff]
        %v1361 = vld [vmem:[%s9 + $0x9f8] sm:$0xff]
        %v1362 = vld [vmem:[%s9 + $0xa00] sm:$0xff]
        %v1363 = vld [vmem:[%s9 + $0xa08] sm:$0xff]
        %v1364 = vld [vmem:[%s9 + $0xa10] sm:$0xff]
        %v1365 = vld [vmem:[%s9 + $0xa18] sm:$0xff]
        %v1366 = vld [vmem:[%s9 + $0xa20] sm:$0xff]
        %v1367 = vld [vmem:[%s9 + $0xa28] sm:$0xff]
        %v1368 = vld [vmem:[%s9 + $0xa30] sm:$0xff]
        %v1369 = vld [vmem:[%s9 + $0xa38] sm:$0xff]
        %v1370 = vld [vmem:[%s9 + $0xa40] sm:$0xff]
        %v1371 = vld [vmem:[%s9 + $0xa48] sm:$0xff]
        %v1372 = vld [vmem:[%s9 + $0xa50] sm:$0xff]
        %v1373 = vld [vmem:[%s9 + $0xa58] sm:$0xff]
        %v1374 = vld [vmem:[%s9 + $0xa60] sm:$0xff]
        %v1375 = vld [vmem:[%s9 + $0xa68] sm:$0xff]
        %v1376 = vld [vmem:[%s9 + $0xa70] sm:$0xff]
        %v1377 = vld [vmem:[%s9 + $0xa78] sm:$0xff]
        %v1378 = vld [vmem:[%s9 + $0xa80] sm:$0xff]
        %v1379 = vld [vmem:[%s9 + $0xa88] sm:$0xff]
        %v1380 = vld [vmem:[%s9 + $0xa90] sm:$0xff]
        %v1381 = vld [vmem:[%s9 + $0xa98] sm:$0xff]
        %v1382 = vld [vmem:[%s9 + $0xaa0] sm:$0xff]
        %v1383 = vld [vmem:[%s9 + $0xaa8] sm:$0xff]
        %v1384 = vld [vmem:[%s9 + $0xab0] sm:$0xff]
        %v1385 = vld [vmem:[%s9 + $0xab8] sm:$0xff]
        %v1386 = vld [vmem:[%s9 + $0xac0] sm:$0xff]
        %v1387 = vld [vmem:[%s9 + $0xac8] sm:$0xff]
        %v1388 = vld [vmem:[%s9 + $0xad0] sm:$0xff]
        %v1389 = vld [vmem:[%s9 + $0xad8] sm:$0xff]
        %v1390 = vld [vmem:[%s9 + $0xae0] sm:$0xff]
        %v1391 = vld [vmem:[%s9 + $0xae8] sm:$0xff]
        %v1392 = vld [vmem:[%s9 + $0xaf0] sm:$0xff]
        %v1393 = vld [vmem:[%s9 + $0xaf8] sm:$0xff]
        %v1394 = vld [vmem:[%s9 + $0xb00] sm:$0xff]
        %v1395 = vld [vmem:[%s9 + $0xb08] sm:$0xff]
        %v1396 = vld [vmem:[%s9 + $0xb10] sm:$0xff]
        %v1397 = vld [vmem:[%s9 + $0xb18] sm:$0xff]
        %v1398 = vld [vmem:[%s9 + $0xb20] sm:$0xff]
        %v1399 = vld [vmem:[%s9 + $0xb28] sm:$0xff]
        %v1400 = vld [vmem:[%s9 + $0xb30] sm:$0xff]
        %v1401 = vld [vmem:[%s9 + $0xb38] sm:$0xff]
        %v1402 = vld [vmem:[%s9 + $0xb40] sm:$0xff]
        %v1403 = vld [vmem:[%s9 + $0xb48] sm:$0xff]
        %v1404 = vld [vmem:[%s9 + $0xb50] sm:$0xff]
        %v1405 = vld [vmem:[%s9 + $0xb58] sm:$0xff]
        %v1406 = vld [vmem:[%s9 + $0xb60] sm:$0xff]
        %v1407 = vld [vmem:[%s9 + $0xb68] sm:$0xff]
        %v1408 = vld [vmem:[%s9 + $0xb70] sm:$0xff]
        %v1409 = vld [vmem:[%s9 + $0xb78] sm:$0xff]
        %v1410 = vld [vmem:[%s9 + $0xb80] sm:$0xff]
        %v1411 = vld [vmem:[%s9 + $0xb88] sm:$0xff]
        %v1412 = vld [vmem:[%s9 + $0xb90] sm:$0xff]
        %v1413 = vld [vmem:[%s9 + $0xb98] sm:$0xff]
        %v1414 = vld [vmem:[%s9 + $0xba0] sm:$0xff]
        %v1415 = vld [vmem:[%s9 + $0xba8] sm:$0xff]
        %v1416 = vld [vmem:[%s9 + $0xbb0] sm:$0xff]
        %v1417 = vld [vmem:[%s9 + $0xbb8] sm:$0xff]
        %v1418 = vld [vmem:[%s9 + $0xbc0] sm:$0xff]
        %v1419 = vld [vmem:[%s9 + $0xbc8] sm:$0xff]
        %v1420 = vld [vmem:[%s9 + $0xbd0] sm:$0xff]
        %v1421 = vld [vmem:[%s9 + $0xbd8] sm:$0xff]
        %v1422 = vld [vmem:[%s9 + $0xbe0] sm:$0xff]
        %v1423 = vld [vmem:[%s9 + $0xbe8] sm:$0xff]
        %v1424 = vld [vmem:[%s9 + $0xbf0] sm:$0xff]
        %v1425 = vld [vmem:[%s9 + $0xbf8] sm:$0xff]
        %v1426 = vld [vmem:[%s9 + $0xc00] sm:$0xff]
        %v1427 = vld [vmem:[%s9 + $0xc08] sm:$0xff]
        %v1428 = vld [vmem:[%s9 + $0xc10] sm:$0xff]
        %v1429 = vld [vmem:[%s9 + $0xc18] sm:$0xff]
        %v1430 = vld [vmem:[%s9 + $0xc20] sm:$0xff]
        %v1431 = vld [vmem:[%s9 + $0xc28] sm:$0xff]
        %v1432 = vld [vmem:[%s9 + $0xc30] sm:$0xff]
        %v1433 = vld [vmem:[%s9 + $0xc38] sm:$0xff]
        %v1434 = vld [vmem:[%s9 + $0xc40] sm:$0xff]
        %v1435 = vld [vmem:[%s9 + $0xc48] sm:$0xff]
        %v1436 = vld [vmem:[%s9 + $0xc50] sm:$0xff]
        %v1437 = vld [vmem:[%s9 + $0xc58] sm:$0xff]
        %v1438 = vld [vmem:[%s9 + $0xc60] sm:$0xff]
        %v1439 = vld [vmem:[%s9 + $0xc68] sm:$0xff]
        %v1440 = vld [vmem:[%s9 + $0xc70] sm:$0xff]
        %v1441 = vld [vmem:[%s9 + $0xc78] sm:$0xff]
        %v1442 = vld [vmem:[%s9 + $0xc80] sm:$0xff]
        %v1443 = vld [vmem:[%s9 + $0xc88] sm:$0xff]
        %v1444 = vld [vmem:[%s9 + $0xc90] sm:$0xff]
        %v1445 = vld [vmem:[%s9 + $0xc98] sm:$0xff]
        %v1446 = vld [vmem:[%s9 + $0xca0] sm:$0xff]
        %v1447 = vld [vmem:[%s9 + $0xca8] sm:$0xff]
        %v1448 = vld [vmem:[%s9 + $0xcb0] sm:$0xff]
        %v1449 = vld [vmem:[%s9 + $0xcb8] sm:$0xff]
        %v1450 = vld [vmem:[%s9 + $0xcc0] sm:$0xff]
        %v1451 = vld [vmem:[%s9 + $0xcc8] sm:$0xff]
        %v1452 = vld [vmem:[%s9 + $0xcd0] sm:$0xff]
        %v1453 = vld [vmem:[%s9 + $0xcd8] sm:$0xff]
        %v1454 = vld [vmem:[%s9 + $0xce0] sm:$0xff]
        %v1455 = vld [vmem:[%s9 + $0xce8] sm:$0xff]
        %v1456 = vld [vmem:[%s9 + $0xcf0] sm:$0xff]
        %v1457 = vld [vmem:[%s9 + $0xcf8] sm:$0xff]
        %v1458 = vld [vmem:[%s9 + $0xd00] sm:$0xff]
        %v1459 = vld [vmem:[%s9 + $0xd08] sm:$0xff]
        %v1460 = vld [vmem:[%s9 + $0xd10] sm:$0xff]
        %v1461 = vld [vmem:[%s9 + $0xd18] sm:$0xff]
        %v1462 = vld [vmem:[%s9 + $0xd20] sm:$0xff]
        %v1463 = vld [vmem:[%s9 + $0xd28] sm:$0xff]
        %v1464 = vld [vmem:[%s9 + $0xd30] sm:$0xff]
        %v1465 = vld [vmem:[%s9 + $0xd38] sm:$0xff]
        %v1466 = vld [vmem:[%s9 + $0xd40] sm:$0xff]
        %v1467 = vld [vmem:[%s9 + $0xd48] sm:$0xff]
        %v1468 = vld [vmem:[%s9 + $0xd50] sm:$0xff]
        %v1469 = vld [vmem:[%s9 + $0xd58] sm:$0xff]
        %v1470 = vld [vmem:[%s9 + $0xd60] sm:$0xff]
        %v1471 = vld [vmem:[%s9 + $0xd68] sm:$0xff]
        %v1472 = vld [vmem:[%s9 + $0xd70] sm:$0xff]
        %v1473 = vld [vmem:[%s9 + $0xd78] sm:$0xff]
        %v1474 = vld [vmem:[%s9 + $0xd80] sm:$0xff]
        %v1475 = vld [vmem:[%s9 + $0xd88] sm:$0xff]
        %v1476 = vld [vmem:[%s9 + $0xd90] sm:$0xff]
        %v1477 = vld [vmem:[%s9 + $0xd98] sm:$0xff]
        %v1478 = vld [vmem:[%s9 + $0xda0] sm:$0xff]
        %v1479 = vld [vmem:[%s9 + $0xda8] sm:$0xff]
        %v1480 = vld [vmem:[%s9 + $0xdb0] sm:$0xff]
        %v1481 = vld [vmem:[%s9 + $0xdb8] sm:$0xff]
        %v1482 = vld [vmem:[%s9 + $0xdc0] sm:$0xff]
        %v1483 = vld [vmem:[%s9 + $0xdc8] sm:$0xff]
        %v1484 = vld [vmem:[%s9 + $0xdd0] sm:$0xff]
        %v1485 = vld [vmem:[%s9 + $0xdd8] sm:$0xff]
        %v1486 = vld [vmem:[%s9 + $0xde0] sm:$0xff]
        %v1487 = vld [vmem:[%s9 + $0xde8] sm:$0xff]
        %v1488 = vld [vmem:[%s9 + $0xdf0] sm:$0xff]
        %v1489 = vld [vmem:[%s9 + $0xdf8] sm:$0xff]
        %v1490 = vld [vmem:[%s10] sm:$0x7f]
        %v1492 = vlaneseq
        %v1493 = vshrl.u32 %v1492, 7
        %v1494 = vsub.s32 0, %v1493
        %v1495 = vrot.slane %v1490, %v1494
        %v1496 = vlaneseq
        %v1497 = vshrl.u32 %v1496, 7
        %v1498 = vsub.s32 1, %v1497
        %v1499 = vrot.slane %v1490, %v1498
        %v1500 = vlaneseq
        %v1501 = vshrl.u32 %v1500, 7
        %v1502 = vsub.s32 2, %v1501
        %v1503 = vrot.slane %v1490, %v1502
        %v1504 = vlaneseq
        %v1505 = vshrl.u32 %v1504, 7
        %v1506 = vsub.s32 3, %v1505
        %v1507 = vrot.slane %v1490, %v1506
        %v1508 = vlaneseq
        %v1509 = vshrl.u32 %v1508, 7
        %v1510 = vsub.s32 4, %v1509
        %v1511 = vrot.slane %v1490, %v1510
        %v1512 = vlaneseq
        %v1513 = vshrl.u32 %v1512, 7
        %v1514 = vsub.s32 5, %v1513
        %v1515 = vrot.slane %v1490, %v1514
        %v1516 = vlaneseq
        %v1517 = vshrl.u32 %v1516, 7
        %v1518 = vsub.s32 6, %v1517
        %v1519 = vrot.slane %v1490, %v1518
        %1527 = vmatprep.subr.mxu0 %v1043
        %1528 = vmatpush1.msra.mxu0 %v1042
        %1529 = vmatprep.subr.mxu0 %v1050
        %1530 = vmatpush1.msra.mxu0 %v1049
        %1531 = vmatprep.subr.mxu0 %v1057
        %1532 = vmatpush1.msra.mxu0 %v1056
        %1533 = vmatprep.subr.mxu0 %v1064
        %1534 = vmatpush1.msra.mxu0 %v1063
        %1535 = vmatprep.subr.mxu0 %v1071
        %1536 = vmatpush1.msra.mxu0 %v1070
        %1537 = vmatprep.subr.mxu0 %v1078
        %1538 = vmatpush1.msra.mxu0 %v1077
        %1539 = vmatprep.subr.mxu0 %v1085
        %1540 = vmatpush1.msra.mxu0 %v1084
        %1541 = vmatprep.subr.mxu0 %v1092
        %1542 = vmatpush1.msra.mxu0 %v1091
        %1543 = vmatprep.subr.mxu0 %v1099
        %1544 = vmatpush1.msra.mxu0 %v1098
        %1545 = vmatprep.subr.mxu0 %v1106
        %1546 = vmatpush1.msra.mxu0 %v1105
        %1547 = vmatprep.subr.mxu0 %v1113
        %1548 = vmatpush1.msra.mxu0 %v1112
        %1549 = vmatprep.subr.mxu0 %v1120
        %1550 = vmatpush1.msra.mxu0 %v1119
        %1551 = vmatprep.subr.mxu0 %v1127
        %1552 = vmatpush1.msra.mxu0 %v1126
        %1553 = vmatprep.subr.mxu0 %v1134
        %1554 = vmatpush1.msra.mxu0 %v1133
        %1555 = vmatprep.subr.mxu0 %v1141
        %1556 = vmatpush1.msra.mxu0 %v1140
        %1557 = vmatprep.subr.mxu0 %v1148
        %1558 = vmatpush1.msra.mxu0 %v1147
        %1559 = vmatprep.subr.mxu0 %v1155
        %1560 = vmatpush1.msra.mxu0 %v1154
        %1561 = vmatprep.subr.mxu0 %v1162
        %1562 = vmatpush1.msra.mxu0 %v1161
        %1563 = vmatprep.subr.mxu0 %v1169
        %1564 = vmatpush1.msra.mxu0 %v1168
        %1565 = vmatprep.subr.mxu0 %v1176
        %1566 = vmatpush1.msra.mxu0 %v1175
        %1567 = vmatprep.subr.mxu0 %v1183
        %1568 = vmatpush1.msra.mxu0 %v1182
        %1569 = vmatprep.subr.mxu0 %v1190
        %1570 = vmatpush1.msra.mxu0 %v1189
        %1571 = vmatprep.subr.mxu0 %v1197
        %1572 = vmatpush1.msra.mxu0 %v1196
        %1573 = vmatprep.subr.mxu0 %v1204
        %1574 = vmatpush1.msra.mxu0 %v1203
        %1575 = vmatprep.subr.mxu0 %v1211
        %1576 = vmatpush1.msra.mxu0 %v1210
        %1577 = vmatprep.subr.mxu0 %v1218
        %1578 = vmatpush1.msra.mxu0 %v1217
        %1579 = vmatprep.subr.mxu0 %v1225
        %1580 = vmatpush1.msra.mxu0 %v1224
        %1581 = vmatprep.subr.mxu0 %v1232
        %1582 = vmatpush1.msra.mxu0 %v1231
        %1583 = vmatprep.subr.mxu0 %v1239
        %1584 = vmatpush1.msra.mxu0 %v1238
        %1585 = vmatprep.subr.mxu0 %v1246
        %1586 = vmatpush1.msra.mxu0 %v1245
        %1587 = vmatprep.subr.mxu0 %v1253
        %1588 = vmatpush1.msra.mxu0 %v1252
        %1589 = vmatprep.subr.mxu0 %v1260
        %1590 = vmatpush1.msra.mxu0 %v1259
        %1591 = vmatprep.mubr.f32.mxu0 %v1035
        %1592 = vmatmul.mubr.f32.gmra.mrb[0].mxu0 %v1034
        %v1593 = vpop.f32.mrb[0].mxu0
        %v1594 = vadd.f32 %v1495, %v1593
        %v1595 = vpop.f32.mrb[0].mxu0
        %v1596 = vadd.f32 %v1499, %v1595
        %1597 = vmatprep.mubr.f32.mxu0 %v1039
        %1598 = vmatmul.mubr.f32.gmra.mrb[0].mxu0 %v1038
        %v1599 = vpop.f32.mrb[0].mxu0
        %v1600 = vadd.f32 %v1495, %v1599
        %v1601 = vpop.f32.mrb[0].mxu0
        %v1602 = vadd.f32 %v1499, %v1601
        %1603 = vdwg.mxu0
        %1604 = vmatprep.subr.mxu0 %v1267
        %1605 = vmatpush1.msra.mxu0 %v1266
        %1606 = vmatprep.subr.mxu0 %v1274
        %1607 = vmatpush1.msra.mxu0 %v1273
        %1608 = vmatprep.subr.mxu0 %v1281
        %1609 = vmatpush1.msra.mxu0 %v1280
        %1610 = vmatprep.subr.mxu0 %v1288
        %1611 = vmatpush1.msra.mxu0 %v1287
        %1612 = vmatprep.subr.mxu0 %v1295
        %1613 = vmatpush1.msra.mxu0 %v1294
        %1614 = vmatprep.subr.mxu0 %v1302
        %1615 = vmatpush1.msra.mxu0 %v1301
        %1616 = vmatprep.subr.mxu0 %v1309
        %1617 = vmatpush1.msra.mxu0 %v1308
        %1618 = vmatprep.subr.mxu0 %v1316
        %1619 = vmatpush1.msra.mxu0 %v1315
        %1620 = vmatprep.subr.mxu0 %v1323
        %1621 = vmatpush1.msra.mxu0 %v1322
        %1622 = vmatprep.subr.mxu0 %v1330
        %1623 = vmatpush1.msra.mxu0 %v1329
        %1624 = vmatprep.subr.mxu0 %v1337
        %1625 = vmatpush1.msra.mxu0 %v1336
        %1626 = vmatprep.subr.mxu0 %v1344
        %1627 = vmatpush1.msra.mxu0 %v1343
        %1628 = vmatprep.subr.mxu0 %v1351
        %1629 = vmatpush1.msra.mxu0 %v1350
        %1630 = vmatprep.subr.mxu0 %v1358
        %1631 = vmatpush1.msra.mxu0 %v1357
        %1632 = vmatprep.subr.mxu0 %v1365
        %1633 = vmatpush1.msra.mxu0 %v1364
        %1634 = vmatprep.subr.mxu0 %v1372
        %1635 = vmatpush1.msra.mxu0 %v1371
        %1636 = vmatprep.subr.mxu0 %v1379
        %1637 = vmatpush1.msra.mxu0 %v1378
        %1638 = vmatprep.subr.mxu0 %v1386
        %1639 = vmatpush1.msra.mxu0 %v1385
        %1640 = vmatprep.subr.mxu0 %v1393
        %1641 = vmatpush1.msra.mxu0 %v1392
        %1642 = vmatprep.subr.mxu0 %v1400
        %1643 = vmatpush1.msra.mxu0 %v1399
        %1644 = vmatprep.subr.mxu0 %v1407
        %1645 = vmatpush1.msra.mxu0 %v1406
        %1646 = vmatprep.subr.mxu0 %v1414
        %1647 = vmatpush1.msra.mxu0 %v1413
        %1648 = vmatprep.subr.mxu0 %v1421
        %1649 = vmatpush1.msra.mxu0 %v1420
        %1650 = vmatprep.subr.mxu0 %v1428
        %1651 = vmatpush1.msra.mxu0 %v1427
        %1652 = vmatprep.subr.mxu0 %v1435
        %1653 = vmatpush1.msra.mxu0 %v1434
        %1654 = vmatprep.subr.mxu0 %v1442
        %1655 = vmatpush1.msra.mxu0 %v1441
        %1656 = vmatprep.subr.mxu0 %v1449
        %1657 = vmatpush1.msra.mxu0 %v1448
        %1658 = vmatprep.subr.mxu0 %v1456
        %1659 = vmatpush1.msra.mxu0 %v1455
        %1660 = vmatprep.subr.mxu0 %v1463
        %1661 = vmatpush1.msra.mxu0 %v1462
        %1662 = vmatprep.subr.mxu0 %v1470
        %1663 = vmatpush1.msra.mxu0 %v1469
        %1664 = vmatprep.subr.mxu0 %v1477
        %1665 = vmatpush1.msra.mxu0 %v1476
        %1666 = vmatprep.subr.mxu0 %v1484
        %1667 = vmatpush1.msra.mxu0 %v1483
        %1668 = vmatprep.mubr.f32.mxu0 %v1037
        %1669 = vmatmul.mubr.f32.gmra.mrb[0].mxu0 %v1036
        %v1670 = vpop.f32.mrb[0].mxu0
        %v1671 = vadd.f32 %v1594, %v1670
        %v1672 = vpop.f32.mrb[0].mxu0
        %v1673 = vadd.f32 %v1596, %v1672
        %1674 = vmatprep.mubr.f32.mxu0 %v1041
        %1675 = vmatmul.mubr.f32.gmra.mrb[0].mxu0 %v1040
        %v1676 = vpop.f32.mrb[0].mxu0
        %v1677 = vadd.f32 %v1600, %v1676
        %v1678 = vpop.f32.mrb[0].mxu0
        %v1679 = vadd.f32 %v1602, %v1678
        %1680 = vdwg.mxu0
        %1681 = vmatprep.subr.mxu0 %v1045
        %1682 = vmatpush1.msra.mxu0 %v1044
        %1683 = vmatprep.subr.mxu0 %v1052
        %1684 = vmatpush1.msra.mxu0 %v1051
        %1685 = vmatprep.subr.mxu0 %v1059
        %1686 = vmatpush1.msra.mxu0 %v1058
        %1687 = vmatprep.subr.mxu0 %v1066
        %1688 = vmatpush1.msra.mxu0 %v1065
        %1689 = vmatprep.subr.mxu0 %v1073
        %1690 = vmatpush1.msra.mxu0 %v1072
        %1691 = vmatprep.subr.mxu0 %v1080
        %1692 = vmatpush1.msra.mxu0 %v1079
        %1693 = vmatprep.subr.mxu0 %v1087
        %1694 = vmatpush1.msra.mxu0 %v1086
        %1695 = vmatprep.subr.mxu0 %v1094
        %1696 = vmatpush1.msra.mxu0 %v1093
        %1697 = vmatprep.subr.mxu0 %v1101
        %1698 = vmatpush1.msra.mxu0 %v1100
        %1699 = vmatprep.subr.mxu0 %v1108
        %1700 = vmatpush1.msra.mxu0 %v1107
        %1701 = vmatprep.subr.mxu0 %v1115
        %1702 = vmatpush1.msra.mxu0 %v1114
        %1703 = vmatprep.subr.mxu0 %v1122
        %1704 = vmatpush1.msra.mxu0 %v1121
        %1705 = vmatprep.subr.mxu0 %v1129
        %1706 = vmatpush1.msra.mxu0 %v1128
        %1707 = vmatprep.subr.mxu0 %v1136
        %1708 = vmatpush1.msra.mxu0 %v1135
        %1709 = vmatprep.subr.mxu0 %v1143
        %1710 = vmatpush1.msra.mxu0 %v1142
        %1711 = vmatprep.subr.mxu0 %v1150
        %1712 = vmatpush1.msra.mxu0 %v1149
        %1713 = vmatprep.subr.mxu0 %v1157
        %1714 = vmatpush1.msra.mxu0 %v1156
        %1715 = vmatprep.subr.mxu0 %v1164
        %1716 = vmatpush1.msra.mxu0 %v1163
        %1717 = vmatprep.subr.mxu0 %v1171
        %1718 = vmatpush1.msra.mxu0 %v1170
        %1719 = vmatprep.subr.mxu0 %v1178
        %1720 = vmatpush1.msra.mxu0 %v1177
        %1721 = vmatprep.subr.mxu0 %v1185
        %1722 = vmatpush1.msra.mxu0 %v1184
        %1723 = vmatprep.subr.mxu0 %v1192
        %1724 = vmatpush1.msra.mxu0 %v1191
        %1725 = vmatprep.subr.mxu0 %v1199
        %1726 = vmatpush1.msra.mxu0 %v1198
        %1727 = vmatprep.subr.mxu0 %v1206
        %1728 = vmatpush1.msra.mxu0 %v1205
        %1729 = vmatprep.subr.mxu0 %v1213
        %1730 = vmatpush1.msra.mxu0 %v1212
        %1731 = vmatprep.subr.mxu0 %v1220
        %1732 = vmatpush1.msra.mxu0 %v1219
        %1733 = vmatprep.subr.mxu0 %v1227
        %1734 = vmatpush1.msra.mxu0 %v1226
        %1735 = vmatprep.subr.mxu0 %v1234
        %1736 = vmatpush1.msra.mxu0 %v1233
        %1737 = vmatprep.subr.mxu0 %v1241
        %1738 = vmatpush1.msra.mxu0 %v1240
        %1739 = vmatprep.subr.mxu0 %v1248
        %1740 = vmatpush1.msra.mxu0 %v1247
        %1741 = vmatprep.subr.mxu0 %v1255
        %1742 = vmatpush1.msra.mxu0 %v1254
        %1743 = vmatprep.subr.mxu0 %v1262
        %1744 = vmatpush1.msra.mxu0 %v1261
        %1745 = vmatprep.mubr.f32.mxu0 %v1035
        %1746 = vmatmul.mubr.f32.gmra.mrb[0].mxu0 %v1034
        %v1747 = vpop.f32.mrb[0].mxu0
        %v1748 = vadd.f32 %v1503, %v1747
        %v1749 = vpop.f32.mrb[0].mxu0
        %v1750 = vadd.f32 %v1507, %v1749
        %1751 = vmatprep.mubr.f32.mxu0 %v1039
        %1752 = vmatmul.mubr.f32.gmra.mrb[0].mxu0 %v1038
        %v1753 = vpop.f32.mrb[0].mxu0
        %v1754 = vadd.f32 %v1503, %v1753
        %v1755 = vpop.f32.mrb[0].mxu0
        %v1756 = vadd.f32 %v1507, %v1755
        %1757 = vdwg.mxu0
        %1758 = vmatprep.subr.mxu0 %v1269
        %1759 = vmatpush1.msra.mxu0 %v1268
        %1760 = vmatprep.subr.mxu0 %v1276
        %1761 = vmatpush1.msra.mxu0 %v1275
        %1762 = vmatprep.subr.mxu0 %v1283
        %1763 = vmatpush1.msra.mxu0 %v1282
        %1764 = vmatprep.subr.mxu0 %v1290
        %1765 = vmatpush1.msra.mxu0 %v1289
        %1766 = vmatprep.subr.mxu0 %v1297
        %1767 = vmatpush1.msra.mxu0 %v1296
        %1768 = vmatprep.subr.mxu0 %v1304
        %1769 = vmatpush1.msra.mxu0 %v1303
        %1770 = vmatprep.subr.mxu0 %v1311
        %1771 = vmatpush1.msra.mxu0 %v1310
        %1772 = vmatprep.subr.mxu0 %v1318
        %1773 = vmatpush1.msra.mxu0 %v1317
        %1774 = vmatprep.subr.mxu0 %v1325
        %1775 = vmatpush1.msra.mxu0 %v1324
        %1776 = vmatprep.subr.mxu0 %v1332
        %1777 = vmatpush1.msra.mxu0 %v1331
        %1778 = vmatprep.subr.mxu0 %v1339
        %1779 = vmatpush1.msra.mxu0 %v1338
        %1780 = vmatprep.subr.mxu0 %v1346
        %1781 = vmatpush1.msra.mxu0 %v1345
        %1782 = vmatprep.subr.mxu0 %v1353
        %1783 = vmatpush1.msra.mxu0 %v1352
        %1784 = vmatprep.subr.mxu0 %v1360
        %1785 = vmatpush1.msra.mxu0 %v1359
        %1786 = vmatprep.subr.mxu0 %v1367
        %1787 = vmatpush1.msra.mxu0 %v1366
        %1788 = vmatprep.subr.mxu0 %v1374
        %1789 = vmatpush1.msra.mxu0 %v1373
        %1790 = vmatprep.subr.mxu0 %v1381
        %1791 = vmatpush1.msra.mxu0 %v1380
        %1792 = vmatprep.subr.mxu0 %v1388
        %1793 = vmatpush1.msra.mxu0 %v1387
        %1794 = vmatprep.subr.mxu0 %v1395
        %1795 = vmatpush1.msra.mxu0 %v1394
        %1796 = vmatprep.subr.mxu0 %v1402
        %1797 = vmatpush1.msra.mxu0 %v1401
        %1798 = vmatprep.subr.mxu0 %v1409
        %1799 = vmatpush1.msra.mxu0 %v1408
        %1800 = vmatprep.subr.mxu0 %v1416
        %1801 = vmatpush1.msra.mxu0 %v1415
        %1802 = vmatprep.subr.mxu0 %v1423
        %1803 = vmatpush1.msra.mxu0 %v1422
        %1804 = vmatprep.subr.mxu0 %v1430
        %1805 = vmatpush1.msra.mxu0 %v1429
        %1806 = vmatprep.subr.mxu0 %v1437
        %1807 = vmatpush1.msra.mxu0 %v1436
        %1808 = vmatprep.subr.mxu0 %v1444
        %1809 = vmatpush1.msra.mxu0 %v1443
        %1810 = vmatprep.subr.mxu0 %v1451
        %1811 = vmatpush1.msra.mxu0 %v1450
        %1812 = vmatprep.subr.mxu0 %v1458
        %1813 = vmatpush1.msra.mxu0 %v1457
        %1814 = vmatprep.subr.mxu0 %v1465
        %1815 = vmatpush1.msra.mxu0 %v1464
        %1816 = vmatprep.subr.mxu0 %v1472
        %1817 = vmatpush1.msra.mxu0 %v1471
        %1818 = vmatprep.subr.mxu0 %v1479
        %1819 = vmatpush1.msra.mxu0 %v1478
        %1820 = vmatprep.subr.mxu0 %v1486
        %1821 = vmatpush1.msra.mxu0 %v1485
        %1822 = vmatprep.mubr.f32.mxu0 %v1037
        %1823 = vmatmul.mubr.f32.gmra.mrb[0].mxu0 %v1036
        %v1824 = vpop.f32.mrb[0].mxu0
        %v1825 = vadd.f32 %v1748, %v1824
        %v1826 = vpop.f32.mrb[0].mxu0
        %v1827 = vadd.f32 %v1750, %v1826
        %1828 = vmatprep.mubr.f32.mxu0 %v1041
        %1829 = vmatmul.mubr.f32.gmra.mrb[0].mxu0 %v1040
        %v1830 = vpop.f32.mrb[0].mxu0
        %v1831 = vadd.f32 %v1754, %v1830
        %v1832 = vpop.f32.mrb[0].mxu0
        %v1833 = vadd.f32 %v1756, %v1832
        %1834 = vdwg.mxu0
        %1835 = vmatprep.subr.mxu0 %v1047
        %1836 = vmatpush1.msra.mxu0 %v1046
        %1837 = vmatprep.subr.mxu0 %v1054
        %1838 = vmatpush1.msra.mxu0 %v1053
        %1839 = vmatprep.subr.mxu0 %v1061
        %1840 = vmatpush1.msra.mxu0 %v1060
        %1841 = vmatprep.subr.mxu0 %v1068
        %1842 = vmatpush1.msra.mxu0 %v1067
        %1843 = vmatprep.subr.mxu0 %v1075
        %1844 = vmatpush1.msra.mxu0 %v1074
        %1845 = vmatprep.subr.mxu0 %v1082
        %1846 = vmatpush1.msra.mxu0 %v1081
        %1847 = vmatprep.subr.mxu0 %v1089
        %1848 = vmatpush1.msra.mxu0 %v1088
        %1849 = vmatprep.subr.mxu0 %v1096
        %1850 = vmatpush1.msra.mxu0 %v1095
        %1851 = vmatprep.subr.mxu0 %v1103
        %1852 = vmatpush1.msra.mxu0 %v1102
        %1853 = vmatprep.subr.mxu0 %v1110
        %1854 = vmatpush1.msra.mxu0 %v1109
        %1855 = vmatprep.subr.mxu0 %v1117
        %1856 = vmatpush1.msra.mxu0 %v1116
        %1857 = vmatprep.subr.mxu0 %v1124
        %1858 = vmatpush1.msra.mxu0 %v1123
        %1859 = vmatprep.subr.mxu0 %v1131
        %1860 = vmatpush1.msra.mxu0 %v1130
        %1861 = vmatprep.subr.mxu0 %v1138
        %1862 = vmatpush1.msra.mxu0 %v1137
        %1863 = vmatprep.subr.mxu0 %v1145
        %1864 = vmatpush1.msra.mxu0 %v1144
        %1865 = vmatprep.subr.mxu0 %v1152
        %1866 = vmatpush1.msra.mxu0 %v1151
        %1867 = vmatprep.subr.mxu0 %v1159
        %1868 = vmatpush1.msra.mxu0 %v1158
        %1869 = vmatprep.subr.mxu0 %v1166
        %1870 = vmatpush1.msra.mxu0 %v1165
        %1871 = vmatprep.subr.mxu0 %v1173
        %1872 = vmatpush1.msra.mxu0 %v1172
        %1873 = vmatprep.subr.mxu0 %v1180
        %1874 = vmatpush1.msra.mxu0 %v1179
        %1875 = vmatprep.subr.mxu0 %v1187
        %1876 = vmatpush1.msra.mxu0 %v1186
        %1877 = vmatprep.subr.mxu0 %v1194
        %1878 = vmatpush1.msra.mxu0 %v1193
        %1879 = vmatprep.subr.mxu0 %v1201
        %1880 = vmatpush1.msra.mxu0 %v1200
        %1881 = vmatprep.subr.mxu0 %v1208
        %1882 = vmatpush1.msra.mxu0 %v1207
        %1883 = vmatprep.subr.mxu0 %v1215
        %1884 = vmatpush1.msra.mxu0 %v1214
        %1885 = vmatprep.subr.mxu0 %v1222
        %1886 = vmatpush1.msra.mxu0 %v1221
        %1887 = vmatprep.subr.mxu0 %v1229
        %1888 = vmatpush1.msra.mxu0 %v1228
        %1889 = vmatprep.subr.mxu0 %v1236
        %1890 = vmatpush1.msra.mxu0 %v1235
        %1891 = vmatprep.subr.mxu0 %v1243
        %1892 = vmatpush1.msra.mxu0 %v1242
        %1893 = vmatprep.subr.mxu0 %v1250
        %1894 = vmatpush1.msra.mxu0 %v1249
        %1895 = vmatprep.subr.mxu0 %v1257
        %1896 = vmatpush1.msra.mxu0 %v1256
        %1897 = vmatprep.subr.mxu0 %v1264
        %1898 = vmatpush1.msra.mxu0 %v1263
        %1899 = vmatprep.mubr.f32.mxu0 %v1035
        %1900 = vmatmul.mubr.f32.gmra.mrb[0].mxu0 %v1034
        %v1901 = vpop.f32.mrb[0].mxu0
        %v1902 = vadd.f32 %v1511, %v1901
        %v1903 = vpop.f32.mrb[0].mxu0
        %v1904 = vadd.f32 %v1515, %v1903
        %1905 = vmatprep.mubr.f32.mxu0 %v1039
        %1906 = vmatmul.mubr.f32.gmra.mrb[0].mxu0 %v1038
        %v1907 = vpop.f32.mrb[0].mxu0
        %v1908 = vadd.f32 %v1511, %v1907
        %v1909 = vpop.f32.mrb[0].mxu0
        %v1910 = vadd.f32 %v1515, %v1909
        %1911 = vdwg.mxu0
        %1912 = vmatprep.subr.mxu0 %v1271
        %1913 = vmatpush1.msra.mxu0 %v1270
        %1914 = vmatprep.subr.mxu0 %v1278
        %1915 = vmatpush1.msra.mxu0 %v1277
        %1916 = vmatprep.subr.mxu0 %v1285
        %1917 = vmatpush1.msra.mxu0 %v1284
        %1918 = vmatprep.subr.mxu0 %v1292
        %1919 = vmatpush1.msra.mxu0 %v1291
        %1920 = vmatprep.subr.mxu0 %v1299
        %1921 = vmatpush1.msra.mxu0 %v1298
        %1922 = vmatprep.subr.mxu0 %v1306
        %1923 = vmatpush1.msra.mxu0 %v1305
        %1924 = vmatprep.subr.mxu0 %v1313
        %1925 = vmatpush1.msra.mxu0 %v1312
        %1926 = vmatprep.subr.mxu0 %v1320
        %1927 = vmatpush1.msra.mxu0 %v1319
        %1928 = vmatprep.subr.mxu0 %v1327
        %1929 = vmatpush1.msra.mxu0 %v1326
        %1930 = vmatprep.subr.mxu0 %v1334
        %1931 = vmatpush1.msra.mxu0 %v1333
        %1932 = vmatprep.subr.mxu0 %v1341
        %1933 = vmatpush1.msra.mxu0 %v1340
        %1934 = vmatprep.subr.mxu0 %v1348
        %1935 = vmatpush1.msra.mxu0 %v1347
        %1936 = vmatprep.subr.mxu0 %v1355
        %1937 = vmatpush1.msra.mxu0 %v1354
        %1938 = vmatprep.subr.mxu0 %v1362
        %1939 = vmatpush1.msra.mxu0 %v1361
        %1940 = vmatprep.subr.mxu0 %v1369
        %1941 = vmatpush1.msra.mxu0 %v1368
        %1942 = vmatprep.subr.mxu0 %v1376
        %1943 = vmatpush1.msra.mxu0 %v1375
        %1944 = vmatprep.subr.mxu0 %v1383
        %1945 = vmatpush1.msra.mxu0 %v1382
        %1946 = vmatprep.subr.mxu0 %v1390
        %1947 = vmatpush1.msra.mxu0 %v1389
        %1948 = vmatprep.subr.mxu0 %v1397
        %1949 = vmatpush1.msra.mxu0 %v1396
        %1950 = vmatprep.subr.mxu0 %v1404
        %1951 = vmatpush1.msra.mxu0 %v1403
        %1952 = vmatprep.subr.mxu0 %v1411
        %1953 = vmatpush1.msra.mxu0 %v1410
        %1954 = vmatprep.subr.mxu0 %v1418
        %1955 = vmatpush1.msra.mxu0 %v1417
        %1956 = vmatprep.subr.mxu0 %v1425
        %1957 = vmatpush1.msra.mxu0 %v1424
        %1958 = vmatprep.subr.mxu0 %v1432
        %1959 = vmatpush1.msra.mxu0 %v1431
        %1960 = vmatprep.subr.mxu0 %v1439
        %1961 = vmatpush1.msra.mxu0 %v1438
        %1962 = vmatprep.subr.mxu0 %v1446
        %1963 = vmatpush1.msra.mxu0 %v1445
        %1964 = vmatprep.subr.mxu0 %v1453
        %1965 = vmatpush1.msra.mxu0 %v1452
        %1966 = vmatprep.subr.mxu0 %v1460
        %1967 = vmatpush1.msra.mxu0 %v1459
        %1968 = vmatprep.subr.mxu0 %v1467
        %1969 = vmatpush1.msra.mxu0 %v1466
        %1970 = vmatprep.subr.mxu0 %v1474
        %1971 = vmatpush1.msra.mxu0 %v1473
        %1972 = vmatprep.subr.mxu0 %v1481
        %1973 = vmatpush1.msra.mxu0 %v1480
        %1974 = vmatprep.subr.mxu0 %v1488
        %1975 = vmatpush1.msra.mxu0 %v1487
        %1976 = vmatprep.mubr.f32.mxu0 %v1037
        %1977 = vmatmul.mubr.f32.gmra.mrb[0].mxu0 %v1036
        %v1978 = vpop.f32.mrb[0].mxu0
        %v1979 = vadd.f32 %v1902, %v1978
        %v1980 = vpop.f32.mrb[0].mxu0
        %v1981 = vadd.f32 %v1904, %v1980
        %1982 = vmatprep.mubr.f32.mxu0 %v1041
        %1983 = vmatmul.mubr.f32.gmra.mrb[0].mxu0 %v1040
        %v1984 = vpop.f32.mrb[0].mxu0
        %v1985 = vadd.f32 %v1908, %v1984
        %v1986 = vpop.f32.mrb[0].mxu0
        %v1987 = vadd.f32 %v1910, %v1986
        %1988 = vdwg.mxu0
        %1989 = vmatprep.subr.mxu0 0.0
        %1990 = vmatpush1.msra.mxu0 %v1048
        %1991 = vmatprep.subr.mxu0 0.0
        %1992 = vmatpush1.msra.mxu0 %v1055
        %1993 = vmatprep.subr.mxu0 0.0
        %1994 = vmatpush1.msra.mxu0 %v1062
        %1995 = vmatprep.subr.mxu0 0.0
        %1996 = vmatpush1.msra.mxu0 %v1069
        %1997 = vmatprep.subr.mxu0 0.0
        %1998 = vmatpush1.msra.mxu0 %v1076
        %1999 = vmatprep.subr.mxu0 0.0
        %2000 = vmatpush1.msra.mxu0 %v1083
        %2001 = vmatprep.subr.mxu0 0.0
        %2002 = vmatpush1.msra.mxu0 %v1090
        %2003 = vmatprep.subr.mxu0 0.0
        %2004 = vmatpush1.msra.mxu0 %v1097
        %2005 = vmatprep.subr.mxu0 0.0
        %2006 = vmatpush1.msra.mxu0 %v1104
        %2007 = vmatprep.subr.mxu0 0.0
        %2008 = vmatpush1.msra.mxu0 %v1111
        %2009 = vmatprep.subr.mxu0 0.0
        %2010 = vmatpush1.msra.mxu0 %v1118
        %2011 = vmatprep.subr.mxu0 0.0
        %2012 = vmatpush1.msra.mxu0 %v1125
        %2013 = vmatprep.subr.mxu0 0.0
        %2014 = vmatpush1.msra.mxu0 %v1132
        %2015 = vmatprep.subr.mxu0 0.0
        %2016 = vmatpush1.msra.mxu0 %v1139
        %2017 = vmatprep.subr.mxu0 0.0
        %2018 = vmatpush1.msra.mxu0 %v1146
        %2019 = vmatprep.subr.mxu0 0.0
        %2020 = vmatpush1.msra.mxu0 %v1153
        %2021 = vmatprep.subr.mxu0 0.0
        %2022 = vmatpush1.msra.mxu0 %v1160
        %2023 = vmatprep.subr.mxu0 0.0
        %2024 = vmatpush1.msra.mxu0 %v1167
        %2025 = vmatprep.subr.mxu0 0.0
        %2026 = vmatpush1.msra.mxu0 %v1174
        %2027 = vmatprep.subr.mxu0 0.0
        %2028 = vmatpush1.msra.mxu0 %v1181
        %2029 = vmatprep.subr.mxu0 0.0
        %2030 = vmatpush1.msra.mxu0 %v1188
        %2031 = vmatprep.subr.mxu0 0.0
        %2032 = vmatpush1.msra.mxu0 %v1195
        %2033 = vmatprep.subr.mxu0 0.0
        %2034 = vmatpush1.msra.mxu0 %v1202
        %2035 = vmatprep.subr.mxu0 0.0
        %2036 = vmatpush1.msra.mxu0 %v1209
        %2037 = vmatprep.subr.mxu0 0.0
        %2038 = vmatpush1.msra.mxu0 %v1216
        %2039 = vmatprep.subr.mxu0 0.0
        %2040 = vmatpush1.msra.mxu0 %v1223
        %2041 = vmatprep.subr.mxu0 0.0
        %2042 = vmatpush1.msra.mxu0 %v1230
        %2043 = vmatprep.subr.mxu0 0.0
        %2044 = vmatpush1.msra.mxu0 %v1237
        %2045 = vmatprep.subr.mxu0 0.0
        %2046 = vmatpush1.msra.mxu0 %v1244
        %2047 = vmatprep.subr.mxu0 0.0
        %2048 = vmatpush1.msra.mxu0 %v1251
        %2049 = vmatprep.subr.mxu0 0.0
        %2050 = vmatpush1.msra.mxu0 %v1258
        %2051 = vmatprep.subr.mxu0 0.0
        %2052 = vmatpush1.msra.mxu0 %v1265
        %2053 = vmatprep.mubr.f32.mxu0 %v1035
        %2054 = vmatmul.mubr.f32.gmra.mrb[0].mxu0 %v1034
        %v2055 = vpop.f32.mrb[0].mxu0
        %v2056 = vadd.f32 %v1519, %v2055
        %v2057 = vpop.f32.mrb[0].mxu0
        %2058 = vmatprep.mubr.f32.mxu0 %v1039
        %2059 = vmatmul.mubr.f32.gmra.mrb[0].mxu0 %v1038
        %v2060 = vpop.f32.mrb[0].mxu0
        %v2061 = vadd.f32 %v1519, %v2060
        %v2062 = vpop.f32.mrb[0].mxu0
        %2063 = vdwg.mxu0
        %2064 = vmatprep.subr.mxu0 0.0
        %2065 = vmatpush1.msra.mxu0 %v1272
        %2066 = vmatprep.subr.mxu0 0.0
        %2067 = vmatpush1.msra.mxu0 %v1279
        %2068 = vmatprep.subr.mxu0 0.0
        %2069 = vmatpush1.msra.mxu0 %v1286
        %2070 = vmatprep.subr.mxu0 0.0
        %2071 = vmatpush1.msra.mxu0 %v1293
        %2072 = vmatprep.subr.mxu0 0.0
        %2073 = vmatpush1.msra.mxu0 %v1300
        %2074 = vmatprep.subr.mxu0 0.0
        %2075 = vmatpush1.msra.mxu0 %v1307
        %2076 = vmatprep.subr.mxu0 0.0
        %2077 = vmatpush1.msra.mxu0 %v1314
        %2078 = vmatprep.subr.mxu0 0.0
        %2079 = vmatpush1.msra.mxu0 %v1321
        %2080 = vmatprep.subr.mxu0 0.0
        %2081 = vmatpush1.msra.mxu0 %v1328
        %2082 = vmatprep.subr.mxu0 0.0
        %2083 = vmatpush1.msra.mxu0 %v1335
        %2084 = vmatprep.subr.mxu0 0.0
        %2085 = vmatpush1.msra.mxu0 %v1342
        %2086 = vmatprep.subr.mxu0 0.0
        %2087 = vmatpush1.msra.mxu0 %v1349
        %2088 = vmatprep.subr.mxu0 0.0
        %2089 = vmatpush1.msra.mxu0 %v1356
        %2090 = vmatprep.subr.mxu0 0.0
        %2091 = vmatpush1.msra.mxu0 %v1363
        %2092 = vmatprep.subr.mxu0 0.0
        %2093 = vmatpush1.msra.mxu0 %v1370
        %2094 = vmatprep.subr.mxu0 0.0
        %2095 = vmatpush1.msra.mxu0 %v1377
        %2096 = vmatprep.subr.mxu0 0.0
        %2097 = vmatpush1.msra.mxu0 %v1384
        %2098 = vmatprep.subr.mxu0 0.0
        %2099 = vmatpush1.msra.mxu0 %v1391
        %2100 = vmatprep.subr.mxu0 0.0
        %2101 = vmatpush1.msra.mxu0 %v1398
        %2102 = vmatprep.subr.mxu0 0.0
        %2103 = vmatpush1.msra.mxu0 %v1405
        %2104 = vmatprep.subr.mxu0 0.0
        %2105 = vmatpush1.msra.mxu0 %v1412
        %2106 = vmatprep.subr.mxu0 0.0
        %2107 = vmatpush1.msra.mxu0 %v1419
        %2108 = vmatprep.subr.mxu0 0.0
        %2109 = vmatpush1.msra.mxu0 %v1426
        %2110 = vmatprep.subr.mxu0 0.0
        %2111 = vmatpush1.msra.mxu0 %v1433
        %2112 = vmatprep.subr.mxu0 0.0
        %2113 = vmatpush1.msra.mxu0 %v1440
        %2114 = vmatprep.subr.mxu0 0.0
        %2115 = vmatpush1.msra.mxu0 %v1447
        %2116 = vmatprep.subr.mxu0 0.0
        %2117 = vmatpush1.msra.mxu0 %v1454
        %2118 = vmatprep.subr.mxu0 0.0
        %2119 = vmatpush1.msra.mxu0 %v1461
        %2120 = vmatprep.subr.mxu0 0.0
        %2121 = vmatpush1.msra.mxu0 %v1468
        %2122 = vmatprep.subr.mxu0 0.0
        %2123 = vmatpush1.msra.mxu0 %v1475
        %2124 = vmatprep.subr.mxu0 0.0
        %2125 = vmatpush1.msra.mxu0 %v1482
        %2126 = vmatprep.subr.mxu0 0.0
        %2127 = vmatpush1.msra.mxu0 %v1489
        %2128 = vmatprep.mubr.f32.mxu0 %v1037
        %2129 = vmatmul.mubr.f32.gmra.mrb[0].mxu0 %v1036
        %v2130 = vpop.f32.mrb[0].mxu0
        %v2131 = vadd.f32 %v2056, %v2130
        %v2132 = vpop.f32.mrb[0].mxu0
        %2133 = vmatprep.mubr.f32.mxu0 %v1041
        %2134 = vmatmul.mubr.f32.gmra.mrb[0].mxu0 %v1040
        %v2135 = vpop.f32.mrb[0].mxu0
        %v2136 = vadd.f32 %v2061, %v2135
        %v2137 = vpop.f32.mrb[0].mxu0
        %2138 = vdwg.mxu0
        %v2139 = vmax.f32 %v1671, 0.0
        %v2140 = vmax.f32 %v1673, 0.0
        %v2141 = vmax.f32 %v1825, 0.0
        %v2142 = vmax.f32 %v1827, 0.0
        %v2143 = vmax.f32 %v1979, 0.0
        %v2144 = vmax.f32 %v1981, 0.0
        %v2145 = vmax.f32 %v2131, 0.0
        %v2146 = vmax.f32 %v1677, 0.0
        %v2147 = vmax.f32 %v1679, 0.0
        %v2148 = vmax.f32 %v1831, 0.0
        %v2149 = vmax.f32 %v1833, 0.0
        %v2150 = vmax.f32 %v1985, 0.0
        %v2151 = vmax.f32 %v1987, 0.0
        %v2152 = vmax.f32 %v2136, 0.0
        %2153 = vst [vmem:[%s392] sm:$0xff] %v2139
        %2154 = vst [vmem:[%s392 + $0x8] sm:$0xff] %v2140
        %2155 = vst [vmem:[%s392 + $0x10] sm:$0xff] %v2141
        %2156 = vst [vmem:[%s392 + $0x18] sm:$0xff] %v2142
        %2157 = vst [vmem:[%s392 + $0x20] sm:$0xff] %v2143
        %2158 = vst [vmem:[%s392 + $0x28] sm:$0xff] %v2144
        %2159 = vst.msk [vmem:[%s392 + $0x30] sm:$0xff] %vm426, %v2145
        %2160 = vst [vmem:[%s392 + $0x38] sm:$0xff] %v2146
        %2161 = vst [vmem:[%s392 + $0x40] sm:$0xff] %v2147
        %2162 = vst [vmem:[%s392 + $0x48] sm:$0xff] %v2148
        %2163 = vst [vmem:[%s392 + $0x50] sm:$0xff] %v2149
        %2164 = vst [vmem:[%s392 + $0x58] sm:$0xff] %v2150
        %2165 = vst [vmem:[%s392 + $0x60] sm:$0xff] %v2151
        %2166 = vst.msk [vmem:[%s392 + $0x68] sm:$0xff] %vm426, %v2152
        %s2167 = sand.u32 %s269, 1
        %s2168 = scalar_lea.sflag [#allocation3], %s2167
        %s2169 = sand.u32 %s269, 1
        %s2170 = smul.addr %s2169, 112
        %s2171 = scalar_lea.vmem [#allocation2], %s2170
        // Predicated region
        $region65: #{_lambda_.1} parent=63 // pred_check
          %p2172 = pneg %p279
        $region66: #{_lambda_.1} parent=63 // pred_check_branch
          %2174 = sbr.rel (%p2172) target = $region68
        $region67: #{_lambda_.1} parent=63 // pred_region
          %s2175 = smul.u32 2, %s25
          %s2176 = ssub.s32 3, %s2175
          %p2177 = scmp.lt.s32.totalorder %s2176, 2
          %s2178 = scalar_select %p2177, %s2176, 2
          %s2179 = smul.u32 128, %s2178
          %s2180 = smul.u32 %s2179, 7
          %s2182 = ssub.s32 1792, %s2180
          %2183 = vsyncadd %s2168, %s2182
          %p2184 = scmp.ne.s32.totalorder 0, %s2180
          %s2185 = smul.addr %s2175, 7
          %s2186 = smul.addr %s2185, 128
          %s2187 = scalar_lea.hbm %s11, %s2186
          %s2188 = smul.u32 56, %s2178
          %s2189 = sshll.u32 %s2171, 4
          %s2190 = int_to_ptr.vmem [resolvable:$true] %s2189
          %s2191 = sshll.u32 %s2188, 4
          %2195 = dma.vmem_to_hbm [thread:$0]  (%p2184), %s2190, %s2191, %s2187, %s2168, 896, 896, 56
        $region68: #{_lambda_.1} parent=63 // pred_fallthru
          _
      $region64: #{_lambda_.1} parent=5 // pred_fallthru
        _
      %p2196 = scmp.le.s32.totalorder 2, %s20
      // Predicated region
      $region69: #{_lambda_.1} parent=5 // pred_check
        %p2197 = pneg %p2196
      $region70: #{_lambda_.1} parent=5 // pred_check_branch
        %2199 = sbr.rel (%p2197) target = $region72
      $region71: #{_lambda_.1} parent=5 // pred_region
        %s2200 = ssub.s32 %s20, 2
        // Predicated region
        $region73: #{_lambda_.1} parent=71 // pred_check
          %p2201 = pneg %p285
        $region74: #{_lambda_.1} parent=71 // pred_check_branch
          %2203 = sbr.rel (%p2201) target = $region76
        $region75: #{_lambda_.1} parent=71 // pred_region
          %s2204 = sand.u32 %s270, 1
          %s2205 = scalar_lea.sflag [#allocation3], %s2204
          %s2206 = sand.u32 %s270, 1
          %s2207 = smul.addr %s2206, 112
          %s2208 = scalar_lea.vmem [#allocation2], %s2207
          %2209 = dma.done %s2205, 1792
        $region76: #{_lambda_.1} parent=71 // pred_fallthru
          _
      $region72: #{_lambda_.1} parent=5 // pred_fallthru
        _
    $region6: #{_lambda_.1} parent=1 // loop_footer
      %s24 = sadd.s32 1, %s20
    $region7: #{_lambda_.1} parent=1 // loop_footer_branch
      %19 = sbr.rel target = $region3
    $region8: #{_lambda_.1} parent=1 // loop_exit
      _
    %2210 = vsyncpa [#allocation3], 1
    %s2211 = scalar_lea.sflag [#allocation3], 1
    %2212 = vsyncpa %s2211, 1

</llo_original>
